<compile_context>
chip_gen: v7x
topology: tpu7x:2x2x1
jax: 0.10.0
libtpu: 0.0.40
codegen_flags: <defaults>
</compile_context>

<pallas_src>
from functools import partial

import numpy as np
import jax
import jax.numpy as jnp
from jax.experimental import pallas as pl
from jax.experimental.pallas import tpu as pltpu


def _round_up(x, m):
    return (x + m - 1) // m * m


def expert_forward_kernel(lens_ref,                       # SMEM (B_pad,) int32
                          feats_ref,                      # (Bblk, Tt, Du) native dtype
                          invlen_ref, nums_ref,           # (1, Bblk, 1) f32
                          wc_ref, bc_ref, w1_ref, b1_ref, w2_ref, b2_ref,
                          ytrue_ref,                      # (1, Bblk, Cp) f32
                          pred_ref, stats_ref,            # outputs
                          acc_ref,                        # (Bblk, Du) f32 scratch
                          *, n_classes, t_tile, b_blk):
    bi = pl.program_id(0)          # batch block (parallel axis)
    ti = pl.program_id(1)          # time tile (reduction axis, last)

    @pl.when(ti == 0)
    def _():
        acc_ref[...] = jnp.zeros_like(acc_ref)

    # ---- masked partial sums over this T tile (VPU select + sublane reduce) -
    # Edge tiles (T % Tt != 0 or B % Bblk != 0) contain uninitialized VMEM in
    # their out-of-bounds rows, so zero the features with a select (never a
    # 0/1 multiply, which would propagate 0*NaN).
    t_pos = ti * t_tile + jax.lax.broadcasted_iota(jnp.int32, (t_tile, 1), 0)
    for r in range(b_blk):                          # b_blk is small & static
        length = lens_ref[bi * b_blk + r]           # int32 scalar from SMEM
        fr = jnp.where(t_pos < length, feats_ref[r], 0).astype(jnp.float32)
        acc_ref[r:r + 1, :] += jnp.sum(fr, axis=0, keepdims=True)

    # ---- finalize on the last T tile: pooled -> connector -> heads + loss ---
    @pl.when(ti == pl.num_programs(1) - 1)
    def _():
        pooled = acc_ref[...] * invlen_ref[0]                               # (Bblk, Du)

        # connector Linear (pool-then-project == project-then-pool, exact)
        proj = jnp.dot(pooled, wc_ref[...],
                       preferred_element_type=jnp.float32) + bc_ref[...]    # (Bblk, Dinp)

        # multi-label head
        logits = jnp.dot(proj, w1_ref[...],
                         preferred_element_type=jnp.float32) + b1_ref[...]  # (Bblk, Cp)
        predicted = 1.0 / (1.0 + jnp.exp(-logits))                          # sigmoid
        pred_ref[0] = predicted

        # label-count regression head (padded to 128 lanes; col 0 is real)
        pnum = jnp.dot(proj, w2_ref[...],
                       preferred_element_type=jnp.float32) + b2_ref[...]    # (Bblk, 128)
        pred_num = pnum[:, 0:1]                                             # (Bblk, 1)

        # BCE from logits (stable): softplus(z) - y*z, masked to real classes
        yt = ytrue_ref[0]                                                   # (Bblk, Cp)
        col = jax.lax.broadcasted_iota(jnp.int32, logits.shape, 1)
        valid_c = col < n_classes
        softplus = jnp.maximum(logits, 0.0) + jnp.log(1.0 + jnp.exp(-jnp.abs(logits)))
        bce_row = jnp.sum(jnp.where(valid_c, softplus - yt * logits, 0.0),
                          axis=1, keepdims=True)                            # (Bblk, 1)

        # squared error for the count head
        se_row = (pred_num - nums_ref[0]) ** 2                              # (Bblk, 1)

        # lane-dense per-sample stats slab: [pred_num, bce_sum, se, 0, ...]
        lane = jax.lax.broadcasted_iota(
            jnp.int32, (pred_num.shape[0], stats_ref.shape[-1]), 1)
        stats = jnp.where(lane == 0, pred_num,
                          jnp.where(lane == 1, bce_row,
                                    jnp.where(lane == 2, se_row, 0.0)))
        stats_ref[0] = stats


def downstream_expert_forward(feats_padded, feats_len, params,
                              label_truth, label_num, *,
                              t_tile=1024, b_blk=8,
                              feats_vmem_budget=16 * 1024 * 1024):
    """feats_padded: [B, T, Du] (f32 or bf16 - pass bf16 for 2x HBM bandwidth),
       feats_len: [B] int, params: {'wc': [Du,Din], 'bc': [1,Din],
       'w1': [Din,C], 'b1': [1,C], 'w2': [Din,1], 'b2': [1,1]},
       label_truth: [B, C] multi-hot, label_num: [B, 1] counts."""
    B, T, Du = feats_padded.shape
    Din = params["wc"].shape[1]
    C = params["w1"].shape[1]
    LANE = 128
    Dinp = _round_up(Din, LANE)
    Cp = _round_up(C, LANE)
    Np = LANE
    itemsize = jnp.dtype(feats_padded.dtype).itemsize

    # ---- tile selection; the feature tensor itself is never copied/padded ---
    b_blk = max(1, min(b_blk, B))
    if T <= t_tile:
        t_tile = T                         # block dim == full dim: always legal
    else:
        t_tile = max(8, (t_tile // 8) * 8)

    def fits(bb, tt):                      # feats tile, double-buffered
        return 2 * bb * tt * Du * itemsize <= feats_vmem_budget

    while not fits(b_blk, t_tile) and t_tile > 8:
        t_tile = max(8, ((t_tile // 2) // 8) * 8)
    while not fits(b_blk, t_tile) and b_blk > 1:
        b_blk = max(1, b_blk // 2)

    nB = -(-B // b_blk)
    nT = -(-T // t_tile)
    B_pad = nB * b_blk

    def pad2(a, rows, cols):
        a = jnp.asarray(a, jnp.float32)
        return jnp.pad(a, ((0, rows - a.shape[0]), (0, cols - a.shape[1])))

    # tiny per-row / weight tensors only (feats stays as-is)
    wc_p = pad2(params["wc"], Du, Dinp)
    bc_p = pad2(params["bc"], 1, Dinp)
    w1_p = pad2(params["w1"], Dinp, Cp)
    b1_p = pad2(params["b1"], 1, Cp)
    w2_p = pad2(params["w2"], Dinp, Np)
    b2_p = pad2(params["b2"], 1, Np)

    lens_i = jnp.pad(feats_len.astype(jnp.int32).reshape(B), (0, B_pad - B))
    invlen = (1.0 / jnp.maximum(lens_i.astype(jnp.float32), 1.0)).reshape(nB, b_blk, 1)
    nums_f = jnp.pad(jnp.asarray(label_num, jnp.float32).reshape(B, 1),
                     ((0, B_pad - B), (0, 0))).reshape(nB, b_blk, 1)
    yt_p = pad2(label_truth, B_pad, Cp).reshape(nB, b_blk, Cp)

    kernel = partial(expert_forward_kernel, n_classes=C, t_tile=t_tile, b_blk=b_blk)
    smem_spec = pl.BlockSpec(memory_space=pltpu.MemorySpace.SMEM)

    pred_p, stats = pl.pallas_call(
        kernel,
        out_shape=(jax.ShapeDtypeStruct((nB, b_blk, Cp), jnp.float32),
                   jax.ShapeDtypeStruct((nB, b_blk, Np), jnp.float32)),
        grid=(nB, nT),
        in_specs=[
            smem_spec,                                                     # lengths
            pl.BlockSpec((b_blk, t_tile, Du), lambda bi, ti: (bi, ti, 0)), # feats tile
            pl.BlockSpec((1, b_blk, 1), lambda bi, ti: (bi, 0, 0)),        # 1 / len
            pl.BlockSpec((1, b_blk, 1), lambda bi, ti: (bi, 0, 0)),        # label counts
            pl.BlockSpec((Du, Dinp), lambda bi, ti: (0, 0)),               # connector W
            pl.BlockSpec((1, Dinp), lambda bi, ti: (0, 0)),                # connector b
            pl.BlockSpec((Dinp, Cp), lambda bi, ti: (0, 0)),               # class head W
            pl.BlockSpec((1, Cp), lambda bi, ti: (0, 0)),                  # class head b
            pl.BlockSpec((Dinp, Np), lambda bi, ti: (0, 0)),               # count head W
            pl.BlockSpec((1, Np), lambda bi, ti: (0, 0)),                  # count head b
            pl.BlockSpec((1, b_blk, Cp), lambda bi, ti: (bi, 0, 0)),       # multi-hot labels
        ],
        out_specs=(pl.BlockSpec((1, b_blk, Cp), lambda bi, ti: (bi, 0, 0)),
                   pl.BlockSpec((1, b_blk, Np), lambda bi, ti: (bi, 0, 0))),
        scratch_shapes=[pltpu.VMEM((b_blk, Du), jnp.float32)],
        compiler_params=pltpu.CompilerParams(
            dimension_semantics=("parallel", "arbitrary"),
            vmem_limit_bytes=48 * 1024 * 1024),
    )(lens_i, feats_padded, invlen, nums_f,
      wc_p, bc_p, w1_p, b1_p, w2_p, b2_p, yt_p)

    pred_flat = pred_p.reshape(B_pad, Cp)
    stats_flat = stats.reshape(B_pad, Np)
    predicted = pred_flat[:B, :C]                 # [B, C] sigmoid probs
    predicted_labels = stats_flat[:B, 0:1]        # [B, 1] count regression
    loss = jnp.sum(stats_flat[:B, 1]) / (B * C) + jnp.sum(stats_flat[:B, 2]) / B
    return predicted, predicted_labels, loss


def reference_forward(feats_padded, feats_len, params, label_truth, label_num):
    # Pure-JAX reference matching the PyTorch module semantics.
    proj = feats_padded.astype(jnp.float32) @ params["wc"] + params["bc"]    # [B,T,Din]
    T = feats_padded.shape[1]
    mask = (jnp.arange(T)[None, :, None] < feats_len[:, None, None]).astype(jnp.float32)
    pooled = jnp.sum(proj * mask, axis=1) / feats_len[:, None].astype(jnp.float32)
    logits = pooled @ params["w1"] + params["b1"]
    predicted = jax.nn.sigmoid(logits)
    pred_num = pooled @ params["w2"] + params["b2"]
    log_p = jnp.maximum(jnp.log(predicted), -100.0)
    log_1mp = jnp.maximum(jnp.log(1.0 - predicted), -100.0)
    bce = jnp.mean(-(label_truth * log_p + (1.0 - label_truth) * log_1mp))
    mse = jnp.mean((pred_num - label_num) ** 2)
    return predicted, pred_num, bce + mse


if __name__ == "__main__":
    key = jax.random.PRNGKey(0)
    B = 2
    upstream_dim = 32          # upstream representation dim
    input_dim = 16             # modelrc['input_dim'] (connector output)
    instruments_num = 10       # dataset.instruments_num
    frame_lens = [13, 9]       # variable-length features per utterance
    T = max(frame_lens)        # pad_sequence(batch_first=True) padded length

    k_feat, k_wc, k_bc, k_w1, k_b1, k_w2, k_b2 = jax.random.split(key, 7)

    # variable-length features (glue: pad_sequence equivalent)
    feats_list = [
        jax.random.normal(jax.random.fold_in(k_feat, i), (L, upstream_dim), jnp.float32)
        for i, L in enumerate(frame_lens)
    ]
    feats_padded = jnp.stack(
        [jnp.pad(f, ((0, T - f.shape[0]), (0, 0))) for f in feats_list], axis=0)
    feats_len = jnp.array(frame_lens, dtype=jnp.int32)

    params = {
        "wc": 0.1 * jax.random.normal(k_wc, (upstream_dim, input_dim), jnp.float32),
        "bc": 0.1 * jax.random.normal(k_bc, (1, input_dim), jnp.float32),
        "w1": 0.1 * jax.random.normal(k_w1, (input_dim, instruments_num), jnp.float32),
        "b1": 0.1 * jax.random.normal(k_b1, (1, instruments_num), jnp.float32),
        "w2": 0.1 * jax.random.normal(k_w2, (input_dim, 1), jnp.float32),
        "b2": 0.1 * jax.random.normal(k_b2, (1, 1), jnp.float32),
    }

    # labels: list of instrument indices per sample -> multi-hot + count (glue)
    labels = [[0, 3], [5]]
    lt = np.zeros((B, instruments_num), dtype=np.float32)
    ln = np.zeros((B, 1), dtype=np.float32)
    for b, lab in enumerate(labels):
        ln[b, 0] = float(len(lab))
        for l in lab:
            lt[b, l] = 1.0
    label_truth = jnp.asarray(lt)
    label_num = jnp.asarray(ln)

    # --- f32 run: small t_tile exercises multi-tile + ragged last T tile -----
    predicted, predicted_labels, loss = downstream_expert_forward(
        feats_padded, feats_len, params, label_truth, label_num, t_tile=8)
    jax.block_until_ready((predicted, predicted_labels, loss))

    ref_pred, ref_num, ref_loss = reference_forward(
        feats_padded, feats_len, params, label_truth, label_num)

    assert predicted.shape == (B, instruments_num)
    assert predicted_labels.shape == (B, 1)
    assert np.isfinite(float(loss))
    np.testing.assert_allclose(np.asarray(predicted), np.asarray(ref_pred),
                               rtol=1e-4, atol=1e-4)
    np.testing.assert_allclose(np.asarray(predicted_labels), np.asarray(ref_num),
                               rtol=1e-4, atol=1e-4)
    np.testing.assert_allclose(float(loss), float(ref_loss), rtol=1e-4, atol=1e-4)

    # --- bf16 streaming run (bandwidth path), whole T in one tile ------------
    feats_bf16 = feats_padded.astype(jnp.bfloat16)
    p_bf, n_bf, l_bf = downstream_expert_forward(
        feats_bf16, feats_len, params, label_truth, label_num)
    jax.block_until_ready((p_bf, n_bf, l_bf))
    ref_pred_b, ref_num_b, ref_loss_b = reference_forward(
        feats_bf16.astype(jnp.float32), feats_len, params, label_truth, label_num)
    np.testing.assert_allclose(np.asarray(p_bf), np.asarray(ref_pred_b),
                               rtol=2e-3, atol=2e-3)
    np.testing.assert_allclose(np.asarray(n_bf), np.asarray(ref_num_b),
                               rtol=2e-3, atol=2e-3)
    np.testing.assert_allclose(float(l_bf), float(ref_loss_b), rtol=2e-3, atol=2e-3)

    print("KERNEL_OK")
</pallas_src>

<mosaic_0001>
module attributes {stable_mosaic.version = 11 : i64} {
  func.func @expert_forward_kernel(%arg0: i32, %arg1: i32, %arg2: memref<2xi32, #tpu.memory_space<smem>>, %arg3: memref<2x8x32xf32, #tpu.memory_space<vmem>>, %arg4: memref<1x2x1xf32, #tpu.memory_space<vmem>>, %arg5: memref<1x2x1xf32, #tpu.memory_space<vmem>>, %arg6: memref<32x128xf32, #tpu.memory_space<vmem>>, %arg7: memref<1x128xf32, #tpu.memory_space<vmem>>, %arg8: memref<128x128xf32, #tpu.memory_space<vmem>>, %arg9: memref<1x128xf32, #tpu.memory_space<vmem>>, %arg10: memref<128x128xf32, #tpu.memory_space<vmem>>, %arg11: memref<1x128xf32, #tpu.memory_space<vmem>>, %arg12: memref<1x2x128xf32, #tpu.memory_space<vmem>>, %arg13: memref<1x2x128xf32, #tpu.memory_space<vmem>>, %arg14: memref<1x2x128xf32, #tpu.memory_space<vmem>>, %arg15: memref<2x32xf32, #tpu.memory_space<vmem>>) attributes {dimension_semantics = [#tpu.dimension_semantics<parallel>, #tpu.dimension_semantics<arbitrary>], iteration_bounds = array<i64: 1, 2>, scalar_prefetch = 0 : i64, scratch_operands = 1 : i64, tpu.core_type = #tpu.core_type<tc>, window_params = [{transform_indices = @transform_0, window_bounds = array<i64: 2>}, {transform_indices = @transform_1, window_bounds = array<i64: 2, 8, 32>}, {transform_indices = @transform_2, window_bounds = array<i64: 1, 2, 1>}, {transform_indices = @transform_3, window_bounds = array<i64: 1, 2, 1>}, {pipeline_mode = #tpu.pipeline_mode<synchronous>, transform_indices = @transform_4, window_bounds = array<i64: 32, 128>}, {pipeline_mode = #tpu.pipeline_mode<synchronous>, transform_indices = @transform_5, window_bounds = array<i64: 1, 128>}, {pipeline_mode = #tpu.pipeline_mode<synchronous>, transform_indices = @transform_6, window_bounds = array<i64: 128, 128>}, {pipeline_mode = #tpu.pipeline_mode<synchronous>, transform_indices = @transform_7, window_bounds = array<i64: 1, 128>}, {pipeline_mode = #tpu.pipeline_mode<synchronous>, transform_indices = @transform_8, window_bounds = array<i64: 128, 128>}, {pipeline_mode = #tpu.pipeline_mode<synchronous>, transform_indices = @transform_9, window_bounds = array<i64: 1, 128>}, {transform_indices = @transform_10, window_bounds = array<i64: 1, 2, 128>}, {transform_indices = @transform_11, window_bounds = array<i64: 1, 2, 128>}, {transform_indices = @transform_12, window_bounds = array<i64: 1, 2, 128>}]} {
    %c0_i32 = arith.constant 0 : i32
    %0 = arith.cmpi eq, %arg1, %c0_i32 : i32
    %1 = arith.extui %0 : i1 to i32
    %c0_i32_0 = arith.constant 0 : i32
    %2 = arith.cmpi ne, %1, %c0_i32_0 : i32
    scf.if %2 {
      %cst_20 = arith.constant 0.000000e+00 : f32
      %46 = vector.broadcast %cst_20 : f32 to vector<2x32xf32>
      %c0_21 = arith.constant 0 : index
      %c0_22 = arith.constant 0 : index
      %47 = vector.load %arg15[%c0_21, %c0_22] : memref<2x32xf32, #tpu.memory_space<vmem>>, vector<2x32xf32>
      tpu.vector_store %arg15[%c0_21, %c0_22], %46 {strides = array<i32>} : memref<2x32xf32, #tpu.memory_space<vmem>>, vector<2x32xf32>,
    } else {
    }
    %c8_i32 = arith.constant 8 : i32
    %3 = arith.muli %arg1, %c8_i32 : i32
    %4 = tpu.iota {dimensions = array<i32: 0>} : vector<8x1xi32>
    %5 = vector.broadcast %3 : i32 to vector<8x1xi32>
    %6 = arith.addi %5, %4 : vector<8x1xi32>
    %c2_i32 = arith.constant 2 : i32
    %7 = arith.muli %arg0, %c2_i32 : i32
    %c0_i32_1 = arith.constant 0 : i32
    %8 = arith.addi %7, %c0_i32_1 : i32
    %9 = arith.index_cast %8 : i32 to index
    %10 = memref.load %arg2[%9] : memref<2xi32, #tpu.memory_space<smem>>
    %11 = vector.broadcast %10 : i32 to vector<8x1xi32>
    %12 = arith.cmpi slt, %6, %11 : vector<8x1xi32>
    %c0 = arith.constant 0 : index
    %c0_2 = arith.constant 0 : index
    %c0_3 = arith.constant 0 : index
    %13 = vector.load %arg3[%c0, %c0_2, %c0_3] : memref<2x8x32xf32, #tpu.memory_space<vmem>>, vector<1x8x32xf32>
    %14 = vector.shape_cast %13 : vector<1x8x32xf32> to vector<8x32xf32>
    %c0_i32_4 = arith.constant 0 : i32
    %15 = arith.sitofp %c0_i32_4 : i32 to f32
    %16 = vector.shape_cast %12 : vector<8x1xi1> to vector<8x1xi1>
    %17 = vector.broadcast %16 : vector<8x1xi1> to vector<8x32xi1>
    %18 = vector.broadcast %15 : f32 to vector<8x32xf32>
    %19 = arith.select %17, %14, %18 : vector<8x32xi1>, vector<8x32xf32>
    %c0_5 = arith.constant 0 : index
    %c0_6 = arith.constant 0 : index
    %20 = vector.load %arg15[%c0_5, %c0_6] : memref<2x32xf32, #tpu.memory_space<vmem>>, vector<1x32xf32>
    %cst = arith.constant dense<0.000000e+00> : vector<32xf32>
    %21 = vector.multi_reduction <add>, %19, %cst [0] : vector<8x32xf32> to vector<32xf32>
    %22 = vector.shape_cast %21 : vector<32xf32> to vector<1x32xf32>
    %23 = arith.addf %20, %22 : vector<1x32xf32>
    %c0_7 = arith.constant 0 : index
    %c0_8 = arith.constant 0 : index
    %24 = vector.load %arg15[%c0_7, %c0_8] : memref<2x32xf32, #tpu.memory_space<vmem>>, vector<1x32xf32>
    tpu.vector_store %arg15[%c0_7, %c0_8], %23 {strides = array<i32>} : memref<2x32xf32, #tpu.memory_space<vmem>>, vector<1x32xf32>,
    %c2_i32_9 = arith.constant 2 : i32
    %25 = arith.muli %arg0, %c2_i32_9 : i32
    %c1_i32 = arith.constant 1 : i32
    %26 = arith.addi %25, %c1_i32 : i32
    %27 = arith.index_cast %26 : i32 to index
    %28 = memref.load %arg2[%27] : memref<2xi32, #tpu.memory_space<smem>>
    %29 = vector.broadcast %28 : i32 to vector<8x1xi32>
    %30 = arith.cmpi slt, %6, %29 : vector<8x1xi32>
    %c1 = arith.constant 1 : index
    %c0_10 = arith.constant 0 : index
    %c0_11 = arith.constant 0 : index
    %31 = vector.load %arg3[%c1, %c0_10, %c0_11] : memref<2x8x32xf32, #tpu.memory_space<vmem>>, vector<1x8x32xf32>
    %32 = vector.shape_cast %31 : vector<1x8x32xf32> to vector<8x32xf32>
    %c0_i32_12 = arith.constant 0 : i32
    %33 = arith.sitofp %c0_i32_12 : i32 to f32
    %34 = vector.shape_cast %30 : vector<8x1xi1> to vector<8x1xi1>
    %35 = vector.broadcast %34 : vector<8x1xi1> to vector<8x32xi1>
    %36 = vector.broadcast %33 : f32 to vector<8x32xf32>
    %37 = arith.select %35, %32, %36 : vector<8x32xi1>, vector<8x32xf32>
    %c1_13 = arith.constant 1 : index
    %c0_14 = arith.constant 0 : index
    %38 = vector.load %arg15[%c1_13, %c0_14] : memref<2x32xf32, #tpu.memory_space<vmem>>, vector<1x32xf32>
    %cst_15 = arith.constant dense<0.000000e+00> : vector<32xf32>
    %39 = vector.multi_reduction <add>, %37, %cst_15 [0] : vector<8x32xf32> to vector<32xf32>
    %40 = vector.shape_cast %39 : vector<32xf32> to vector<1x32xf32>
    %41 = arith.addf %38, %40 : vector<1x32xf32>
    %c1_16 = arith.constant 1 : index
    %c0_17 = arith.constant 0 : index
    %42 = vector.load %arg15[%c1_16, %c0_17] : memref<2x32xf32, #tpu.memory_space<vmem>>, vector<1x32xf32>
    tpu.vector_store %arg15[%c1_16, %c0_17], %41 {strides = array<i32>} : memref<2x32xf32, #tpu.memory_space<vmem>>, vector<1x32xf32>,
    %c1_i32_18 = arith.constant 1 : i32
    %43 = arith.cmpi eq, %arg1, %c1_i32_18 : i32
    %44 = arith.extui %43 : i1 to i32
    %c0_i32_19 = arith.constant 0 : i32
    %45 = arith.cmpi ne, %44, %c0_i32_19 : i32
    scf.if %45 {
      %c0_20 = arith.constant 0 : index
      %c0_21 = arith.constant 0 : index
      %46 = vector.load %arg15[%c0_20, %c0_21] : memref<2x32xf32, #tpu.memory_space<vmem>>, vector<2x32xf32>
      %c0_22 = arith.constant 0 : index
      %c0_23 = arith.constant 0 : index
      %c0_24 = arith.constant 0 : index
      %47 = vector.load %arg4[%c0_22, %c0_23, %c0_24] : memref<1x2x1xf32, #tpu.memory_space<vmem>>, vector<1x2x1xf32>
      %48 = vector.shape_cast %47 : vector<1x2x1xf32> to vector<2x1xf32>
      %49 = vector.broadcast %48 : vector<2x1xf32> to vector<2x32xf32>
      %50 = arith.mulf %46, %49 : vector<2x32xf32>
      %c0_25 = arith.constant 0 : index
      %c0_26 = arith.constant 0 : index
      %51 = vector.load %arg6[%c0_25, %c0_26] : memref<32x128xf32, #tpu.memory_space<vmem>>, vector<32x128xf32>
      %cst_27 = arith.constant dense<0.000000e+00> : vector<2x128xf32>
      %52 = tpu.matmul %50, %51, %cst_27 {dimension_numbers = #tpu.dot_dimension_numbers<[1], [0], [0], [1], [0, 0, 1, 1], [], []>} : vector<2x32xf32>, vector<32x128xf32>, vector<2x128xf32> -> vector<2x128xf32>
      %c0_28 = arith.constant 0 : index
      %c0_29 = arith.constant 0 : index
      %53 = vector.load %arg7[%c0_28, %c0_29] : memref<1x128xf32, #tpu.memory_space<vmem>>, vector<1x128xf32>
      %54 = vector.broadcast %53 : vector<1x128xf32> to vector<2x128xf32>
      %55 = arith.addf %52, %54 : vector<2x128xf32>
      %c0_30 = arith.constant 0 : index
      %c0_31 = arith.constant 0 : index
      %56 = vector.load %arg8[%c0_30, %c0_31] : memref<128x128xf32, #tpu.memory_space<vmem>>, vector<128x128xf32>
      %cst_32 = arith.constant dense<0.000000e+00> : vector<2x128xf32>
      %57 = tpu.matmul %55, %56, %cst_32 {dimension_numbers = #tpu.dot_dimension_numbers<[1], [0], [0], [1], [0, 0, 1, 1], [], []>} : vector<2x128xf32>, vector<128x128xf32>, vector<2x128xf32> -> vector<2x128xf32>
      %c0_33 = arith.constant 0 : index
      %c0_34 = arith.constant 0 : index
      %58 = vector.load %arg9[%c0_33, %c0_34] : memref<1x128xf32, #tpu.memory_space<vmem>>, vector<1x128xf32>
      %59 = vector.broadcast %58 : vector<1x128xf32> to vector<2x128xf32>
      %60 = arith.addf %57, %59 : vector<2x128xf32>
      %cst_35 = arith.constant 0.000000e+00 : f32
      %61 = vector.broadcast %cst_35 : f32 to vector<2x128xf32>
      %62 = arith.subf %61, %60 : vector<2x128xf32>
      %63 = math.exp %62 : vector<2x128xf32>
      %cst_36 = arith.constant 1.000000e+00 : f32
      %64 = vector.broadcast %cst_36 : f32 to vector<2x128xf32>
      %65 = arith.addf %64, %63 : vector<2x128xf32>
      %cst_37 = arith.constant 1.000000e+00 : f32
      %66 = vector.broadcast %cst_37 : f32 to vector<2x128xf32>
      %67 = arith.divf %66, %65 : vector<2x128xf32>
      %c0_38 = arith.constant 0 : index
      %c0_39 = arith.constant 0 : index
      %c0_40 = arith.constant 0 : index
      %68 = vector.load %arg13[%c0_38, %c0_39, %c0_40] : memref<1x2x128xf32, #tpu.memory_space<vmem>>, vector<1x2x128xf32>
      %69 = vector.shape_cast %68 : vector<1x2x128xf32> to vector<2x128xf32>
      %70 = vector.shape_cast %67 : vector<2x128xf32> to vector<1x2x128xf32>
      tpu.vector_store %arg13[%c0_38, %c0_39, %c0_40], %70 {strides = array<i32>} : memref<1x2x128xf32, #tpu.memory_space<vmem>>, vector<1x2x128xf32>,
      %c0_41 = arith.constant 0 : index
      %c0_42 = arith.constant 0 : index
      %71 = vector.load %arg10[%c0_41, %c0_42] : memref<128x128xf32, #tpu.memory_space<vmem>>, vector<128x128xf32>
      %cst_43 = arith.constant dense<0.000000e+00> : vector<2x128xf32>
      %72 = tpu.matmul %55, %71, %cst_43 {dimension_numbers = #tpu.dot_dimension_numbers<[1], [0], [0], [1], [0, 0, 1, 1], [], []>} : vector<2x128xf32>, vector<128x128xf32>, vector<2x128xf32> -> vector<2x128xf32>
      %c0_44 = arith.constant 0 : index
      %c0_45 = arith.constant 0 : index
      %73 = vector.load %arg11[%c0_44, %c0_45] : memref<1x128xf32, #tpu.memory_space<vmem>>, vector<1x128xf32>
      %74 = vector.broadcast %73 : vector<1x128xf32> to vector<2x128xf32>
      %75 = arith.addf %72, %74 : vector<2x128xf32>
      %76 = vector.extract_strided_slice %75 {offsets = [0, 0], sizes = [2, 1], strides = [1, 1]} : vector<2x128xf32> to vector<2x1xf32>
      %c0_46 = arith.constant 0 : index
      %c0_47 = arith.constant 0 : index
      %c0_48 = arith.constant 0 : index
      %77 = vector.load %arg12[%c0_46, %c0_47, %c0_48] : memref<1x2x128xf32, #tpu.memory_space<vmem>>, vector<1x2x128xf32>
      %78 = vector.shape_cast %77 : vector<1x2x128xf32> to vector<2x128xf32>
      %79 = tpu.iota {dimensions = array<i32: 1>} : vector<2x128xi32>
      %c10_i32 = arith.constant 10 : i32
      %80 = vector.broadcast %c10_i32 : i32 to vector<2x128xi32>
      %81 = arith.cmpi slt, %79, %80 : vector<2x128xi32>
      %cst_49 = arith.constant 0.000000e+00 : f32
      %82 = vector.broadcast %cst_49 : f32 to vector<2x128xf32>
      %83 = arith.maximumf %60, %82 : vector<2x128xf32>
      %84 = math.absf %60 : vector<2x128xf32>
      %cst_50 = arith.constant 0.000000e+00 : f32
      %85 = vector.broadcast %cst_50 : f32 to vector<2x128xf32>
      %86 = arith.subf %85, %84 : vector<2x128xf32>
      %87 = math.exp %86 : vector<2x128xf32>
      %cst_51 = arith.constant 1.000000e+00 : f32
      %88 = vector.broadcast %cst_51 : f32 to vector<2x128xf32>
      %89 = arith.addf %88, %87 : vector<2x128xf32>
      %90 = math.log %89 : vector<2x128xf32>
      %91 = arith.addf %83, %90 : vector<2x128xf32>
      %92 = arith.mulf %78, %60 : vector<2x128xf32>
      %93 = arith.subf %91, %92 : vector<2x128xf32>
      %cst_52 = arith.constant 0.000000e+00 : f32
      %94 = vector.broadcast %cst_52 : f32 to vector<2x128xf32>
      %95 = arith.select %81, %93, %94 : vector<2x128xi1>, vector<2x128xf32>
      %cst_53 = arith.constant dense<0.000000e+00> : vector<2xf32>
      %96 = vector.multi_reduction <add>, %95, %cst_53 [1] : vector<2x128xf32> to vector<2xf32>
      %97 = vector.shape_cast %96 : vector<2xf32> to vector<2x1xf32>
      %c0_54 = arith.constant 0 : index
      %c0_55 = arith.constant 0 : index
      %c0_56 = arith.constant 0 : index
      %98 = vector.load %arg5[%c0_54, %c0_55, %c0_56] : memref<1x2x1xf32, #tpu.memory_space<vmem>>, vector<1x2x1xf32>
      %99 = vector.shape_cast %98 : vector<1x2x1xf32> to vector<2x1xf32>
      %100 = arith.subf %76, %99 : vector<2x1xf32>
      %101 = arith.mulf %100, %100 : vector<2x1xf32>
      %102 = tpu.iota {dimensions = array<i32: 1>} : vector<2x128xi32>
      %c0_i32_57 = arith.constant 0 : i32
      %103 = vector.broadcast %c0_i32_57 : i32 to vector<2x128xi32>
      %104 = arith.cmpi eq, %102, %103 : vector<2x128xi32>
      %c1_i32_58 = arith.constant 1 : i32
      %105 = vector.broadcast %c1_i32_58 : i32 to vector<2x128xi32>
      %106 = arith.cmpi eq, %102, %105 : vector<2x128xi32>
      %c2_i32_59 = arith.constant 2 : i32
      %107 = vector.broadcast %c2_i32_59 : i32 to vector<2x128xi32>
      %108 = arith.cmpi eq, %102, %107 : vector<2x128xi32>
      %cst_60 = arith.constant 0.000000e+00 : f32
      %109 = vector.shape_cast %101 : vector<2x1xf32> to vector<2x1xf32>
      %110 = vector.broadcast %109 : vector<2x1xf32> to vector<2x128xf32>
      %111 = vector.broadcast %cst_60 : f32 to vector<2x128xf32>
      %112 = arith.select %108, %110, %111 : vector<2x128xi1>, vector<2x128xf32>
      %113 = vector.shape_cast %97 : vector<2x1xf32> to vector<2x1xf32>
      %114 = vector.broadcast %113 : vector<2x1xf32> to vector<2x128xf32>
      %115 = arith.select %106, %114, %112 : vector<2x128xi1>, vector<2x128xf32>
      %116 = vector.shape_cast %76 : vector<2x1xf32> to vector<2x1xf32>
      %117 = vector.broadcast %116 : vector<2x1xf32> to vector<2x128xf32>
      %118 = arith.select %104, %117, %115 : vector<2x128xi1>, vector<2x128xf32>
      %c0_61 = arith.constant 0 : index
      %c0_62 = arith.constant 0 : index
      %c0_63 = arith.constant 0 : index
      %119 = vector.load %arg14[%c0_61, %c0_62, %c0_63] : memref<1x2x128xf32, #tpu.memory_space<vmem>>, vector<1x2x128xf32>
      %120 = vector.shape_cast %119 : vector<1x2x128xf32> to vector<2x128xf32>
      %121 = vector.shape_cast %118 : vector<2x128xf32> to vector<1x2x128xf32>
      tpu.vector_store %arg14[%c0_61, %c0_62, %c0_63], %121 {strides = array<i32>} : memref<1x2x128xf32, #tpu.memory_space<vmem>>, vector<1x2x128xf32>,
    } else {
    }
    return
  }
  func.func @transform_0(%arg0: i32, %arg1: i32) -> i32 {
    %c0_i32 = arith.constant 0 : i32
    %c0_i32_0 = arith.constant 0 : i32
    return %c0_i32 : i32
  }
  func.func @transform_1(%arg0: i32, %arg1: i32) -> (i32, i32, i32) {
    %c0_i32 = arith.constant 0 : i32
    %c0_i32_0 = arith.constant 0 : i32
    return %arg0, %arg1, %c0_i32 : i32, i32, i32
  }
  func.func @transform_2(%arg0: i32, %arg1: i32) -> (i32, i32, i32) {
    %c0_i32 = arith.constant 0 : i32
    %c0_i32_0 = arith.constant 0 : i32
    %c0_i32_1 = arith.constant 0 : i32
    return %arg0, %c0_i32, %c0_i32_0 : i32, i32, i32
  }
  func.func @transform_3(%arg0: i32, %arg1: i32) -> (i32, i32, i32) {
    %c0_i32 = arith.constant 0 : i32
    %c0_i32_0 = arith.constant 0 : i32
    %c0_i32_1 = arith.constant 0 : i32
    return %arg0, %c0_i32, %c0_i32_0 : i32, i32, i32
  }
  func.func @transform_4(%arg0: i32, %arg1: i32) -> (i32, i32) {
    %c0_i32 = arith.constant 0 : i32
    %c0_i32_0 = arith.constant 0 : i32
    %c0_i32_1 = arith.constant 0 : i32
    return %c0_i32, %c0_i32_0 : i32, i32
  }
  func.func @transform_5(%arg0: i32, %arg1: i32) -> (i32, i32) {
    %c0_i32 = arith.constant 0 : i32
    %c0_i32_0 = arith.constant 0 : i32
    %c0_i32_1 = arith.constant 0 : i32
    return %c0_i32, %c0_i32_0 : i32, i32
  }
  func.func @transform_6(%arg0: i32, %arg1: i32) -> (i32, i32) {
    %c0_i32 = arith.constant 0 : i32
    %c0_i32_0 = arith.constant 0 : i32
    %c0_i32_1 = arith.constant 0 : i32
    return %c0_i32, %c0_i32_0 : i32, i32
  }
  func.func @transform_7(%arg0: i32, %arg1: i32) -> (i32, i32) {
    %c0_i32 = arith.constant 0 : i32
    %c0_i32_0 = arith.constant 0 : i32
    %c0_i32_1 = arith.constant 0 : i32
    return %c0_i32, %c0_i32_0 : i32, i32
  }
  func.func @transform_8(%arg0: i32, %arg1: i32) -> (i32, i32) {
    %c0_i32 = arith.constant 0 : i32
    %c0_i32_0 = arith.constant 0 : i32
    %c0_i32_1 = arith.constant 0 : i32
    return %c0_i32, %c0_i32_0 : i32, i32
  }
  func.func @transform_9(%arg0: i32, %arg1: i32) -> (i32, i32) {
    %c0_i32 = arith.constant 0 : i32
    %c0_i32_0 = arith.constant 0 : i32
    %c0_i32_1 = arith.constant 0 : i32
    return %c0_i32, %c0_i32_0 : i32, i32
  }
  func.func @transform_10(%arg0: i32, %arg1: i32) -> (i32, i32, i32) {
    %c0_i32 = arith.constant 0 : i32
    %c0_i32_0 = arith.constant 0 : i32
    %c0_i32_1 = arith.constant 0 : i32
    return %arg0, %c0_i32, %c0_i32_0 : i32, i32, i32
  }
  func.func @transform_11(%arg0: i32, %arg1: i32) -> (i32, i32, i32) {
    %c0_i32 = arith.constant 0 : i32
    %c0_i32_0 = arith.constant 0 : i32
    %c0_i32_1 = arith.constant 0 : i32
    return %arg0, %c0_i32, %c0_i32_0 : i32, i32, i32
  }
  func.func @transform_12(%arg0: i32, %arg1: i32) -> (i32, i32, i32) {
    %c0_i32 = arith.constant 0 : i32
    %c0_i32_0 = arith.constant 0 : i32
    %c0_i32_1 = arith.constant 0 : i32
    return %arg0, %c0_i32, %c0_i32_0 : i32, i32, i32
  }
}

</mosaic_0001>

<llo_original>
// kernel: tpu_custom_call.1
$region0: #{tpu_custom_call.1}
  #allocation0 [shape = 'u32[]', space=smem, size = 0x4, offset = 0x4, fixed_abs, tag = 'smem constant byte address 0x4 - core index']
  #allocation1 [shape = 'u32[144,128]{1,0:T(1,128)}', space=vmem, size = 0x12000, scoped, tag = 'internal scratch']
  #allocation2 [shape = 'f32[2,32]{1,0:T(2,128)}', space=vmem, size = 0x400, scoped, tag = 'scratch operand']
  %s0 = inlined_call_operand.vmem [shape: s32[2], index: 0, kind: input, shape index: {}]
  %s1 = inlined_call_operand.vmem [shape: f32[2,13,32], index: 1, kind: input, shape index: {}]
  %s2 = inlined_call_operand.vmem [shape: f32[1,2,1], index: 2, kind: input, shape index: {}]
  %s3 = inlined_call_operand.vmem [shape: f32[1,2,1], index: 3, kind: input, shape index: {}]
  %s4 = inlined_call_operand.vmem [shape: f32[32,128], index: 4, kind: input, shape index: {}]
  %s5 = inlined_call_operand.vmem [shape: f32[1,128], index: 5, kind: input, shape index: {}]
  %s6 = inlined_call_operand.hbm [shape: f32[128,128], index: 6, kind: input, shape index: {}]
  %s7 = inlined_call_operand.vmem [shape: f32[1,128], index: 7, kind: input, shape index: {}]
  %s8 = inlined_call_operand.hbm [shape: f32[128,128], index: 8, kind: input, shape index: {}]
  %s9 = inlined_call_operand.vmem [shape: f32[1,128], index: 9, kind: input, shape index: {}]
  %s10 = inlined_call_operand.vmem [shape: f32[1,2,128], index: 10, kind: input, shape index: {}]
  %s11 = inlined_call_operand.hbm [shape: f32[1,2,128], index: 11, kind: output, shape index: {0}]
  %s12 = inlined_call_operand.hbm [shape: f32[1,2,128], index: 12, kind: output, shape index: {1}]
  %13 = xla_tuple %s11, %s12
  %s14 = sld [smem:[#allocation0]]
  $region143: #{tpu_custom_call.1} parent=0
    _
  %s16 = ssub.s32 1, %s14
  %s17 = scalar_select 0, %s16, %s14
  $region1: #{tpu_custom_call.1} parent=0
    #allocation3 [shape = 'u8[512]{0}', space=smem, size = 0x200, scoped, tag = 'input window, operand 0, single buffered']
    #allocation4 [shape = 's32[2]{0}', space=sflag, size = 0x8, scoped, tag = 'scoped memory for tpu_custom_call.1']
    #allocation5 [shape = 's32[2]{0}', space=sflag, size = 0x8, scoped, tag = 'scoped memory for tpu_custom_call.1']
    #allocation6 [shape = 's32[2]{0}', space=sflag, size = 0x8, scoped, tag = 'scoped memory for tpu_custom_call.1']
    #allocation7 [shape = 'u8[16384]{0}', space=vmem, size = 0x4000, scoped, tag = 'input window, operand 1']
    #allocation8 [shape = 'u8[65536]{0}', space=vmem, size = 0x10000, scoped, tag = 'input window, operand 6, single buffered']
    #allocation9 [shape = 'u8[65536]{0}', space=vmem, size = 0x10000, scoped, tag = 'input window, operand 8, single buffered']
    #allocation10 [shape = 's32[1]{0}', space=sflag, size = 0x4, scoped, tag = 'scoped memory for tpu_custom_call.1']
    #allocation11 [shape = 'u8[1024]{0}', space=vmem, size = 0x400, scoped, tag = 'output window, operand 0, single buffered']
    #allocation12 [shape = 'u8[1024]{0}', space=vmem, size = 0x400, scoped, tag = 'output window, operand 1, single buffered']
    #allocation13 [shape = 's32[1]{0}', space=sflag, size = 0x4, scoped, tag = 'scoped memory for tpu_custom_call.1']
    %18 = vsyncpa [#allocation6], 0
    %19 = vsyncpa [#allocation4], 0
    %20 = vsyncpa [#allocation10], 0
    %21 = vsyncpa [#allocation5], 0
    %22 = vsyncpa [#allocation13], 0
    loop: start=0, step=1, limit=4
    $region2: #{tpu_custom_call.1} parent=1 // loop_pre_header
      _
    $region3: #{tpu_custom_call.1} parent=1 // loop_header
      %s24 = sphi 0, %s28
      %p25 = scmp.ge.s32.totalorder %s24, 4
      %s31 = sphi 0, %s43
      %s32 = sphi 0, %s39
      %s33 = sphi 0, %s31
      %s34 = sphi 0, %s32
      %s35 = sphi 0, %s33
      %s36 = sphi 0, %s34
      %s44 = sphi 0, %s44
      %s46 = sphi 0, %s44
      %s47 = sphi 0, %s46
      %s61 = sphi 0, %s47
      %s69 = sphi 0, %s71
      %s72 = sphi 0, %s69
      %s73 = sphi 0, %s72
      %s89 = sphi 0, %s73
      %s95 = sphi 0, %s97
      %s98 = sphi 0, %s95
      %s99 = sphi 0, %s98
      %s115 = sphi 0, %s99
      %s121 = sphi 0, %s123
      %s124 = sphi 0, %s121
      %s125 = sphi 0, %s124
      %s141 = sphi 0, %s125
      %s145 = sphi 0, %s145
      %s147 = sphi 0, %s145
      %s148 = sphi 0, %s147
      %s162 = sphi 0, %s148
      %s166 = sphi 0, %s166
      %s168 = sphi 0, %s166
      %s169 = sphi 0, %s168
      %s183 = sphi 0, %s169
      %s187 = sphi 0, %s187
      %s189 = sphi 0, %s187
      %s190 = sphi 0, %s189
      %s204 = sphi 0, %s190
      %s208 = sphi 0, %s208
      %s210 = sphi 0, %s208
      %s211 = sphi 0, %s210
      %s225 = sphi 0, %s211
      %s229 = sphi 0, %s229
      %s231 = sphi 0, %s229
      %s232 = sphi 0, %s231
      %s246 = sphi 0, %s232
      %s250 = sphi 0, %s250
      %s252 = sphi 0, %s250
      %s253 = sphi 0, %s252
      %s267 = sphi 0, %s253
      %s273 = sphi 0, %s275
      %s276 = sphi 0, %s273
      %s277 = sphi 0, %s276
      %s293 = sphi 0, %s277
      %s299 = sphi 0, %s301
      %s302 = sphi 0, %s299
      %s303 = sphi 0, %s302
      %s319 = sphi 0, %s303
      %s325 = sphi 0, %s327
      %s328 = sphi 0, %s325
      %s329 = sphi 0, %s328
      %s345 = sphi 0, %s329
    $region4: #{tpu_custom_call.1} parent=1 // loop_header_branch
      %27 = sbr.rel (%p25) target = $region8
    $region5: #{tpu_custom_call.1} parent=1 // loop_body
      %s29 = ssub.s32 %s24, 1
      %s30 = ssub.s32 %s24, 2
      %s37 = sadd.s32 1, %s32
      %p38 = scmp.ge.s32.totalorder %s37, 2
      %s39 = scalar_select %p38, 0, %s37
      %s40 = sadd.s32 1, %s31
      %s41 = scalar_select %p38, %s40, %s31
      %p42 = scmp.ge.s32.totalorder %s41, 1
      %s43 = scalar_select %p42, 0, %s41
      %s45 = sadd.s32 %s44, 1
      %p48 = scmp.eq.s32.totalorder %s24, 1
      %p49 = scmp.ne.s32.totalorder %s44, %s46
      %p50 = scmp.eq.s32.totalorder %s24, 0
      %p51 = por %p49, %p50
      %p52 = scmp.ne.s32.totalorder %s44, %s46
      %p53 = scmp.eq.s32.totalorder %s29, 1
      %p54 = por %p52, %p53
      %p55 = scmp.ne.s32.totalorder %s46, %s47
      %p56 = scmp.eq.s32.totalorder %s29, 0
      %p57 = por %p55, %p56
      %p58 = scmp.ne.s32.totalorder %s46, %s47
      %p59 = scmp.eq.s32.totalorder %s30, 1
      %p60 = por %p58, %p59
      %p62 = scmp.ne.s32.totalorder %s47, %s61
      %p63 = scmp.eq.s32.totalorder %s30, 0
      %p64 = por %p62, %p63
      %s65 = ssub.s32 %s31, %s43
      %s66 = ssub.s32 %s32, %s39
      %s67 = sor.u32 %s65, %s66
      %p68 = scmp.eq.s32.totalorder %s67, 0
      %s70 = sadd.s32 %s69, 1
      %s71 = scalar_select %p68, %s69, %s70
      %p74 = pneg %p68
      %p75 = scmp.eq.s32.totalorder %s24, 1
      %p76 = por %p74, %p75
      %p77 = scmp.ne.s32.totalorder %s69, %s72
      %p78 = scmp.eq.s32.totalorder %s24, 0
      %p79 = por %p77, %p78
      %p80 = scmp.ne.s32.totalorder %s69, %s72
      %p81 = scmp.eq.s32.totalorder %s29, 1
      %p82 = por %p80, %p81
      %p83 = scmp.ne.s32.totalorder %s72, %s73
      %p84 = scmp.eq.s32.totalorder %s29, 0
      %p85 = por %p83, %p84
      %p86 = scmp.ne.s32.totalorder %s72, %s73
      %p87 = scmp.eq.s32.totalorder %s30, 1
      %p88 = por %p86, %p87
      %p90 = scmp.ne.s32.totalorder %s73, %s89
      %p91 = scmp.eq.s32.totalorder %s30, 0
      %p92 = por %p90, %p91
      %s93 = ssub.s32 %s31, %s43
      %p94 = scmp.eq.s32.totalorder %s93, 0
      %s96 = sadd.s32 %s95, 1
      %s97 = scalar_select %p94, %s95, %s96
      %p100 = pneg %p94
      %p101 = scmp.eq.s32.totalorder %s24, 1
      %p102 = por %p100, %p101
      %p103 = scmp.ne.s32.totalorder %s95, %s98
      %p104 = scmp.eq.s32.totalorder %s24, 0
      %p105 = por %p103, %p104
      %p106 = scmp.ne.s32.totalorder %s95, %s98
      %p107 = scmp.eq.s32.totalorder %s29, 1
      %p108 = por %p106, %p107
      %p109 = scmp.ne.s32.totalorder %s98, %s99
      %p110 = scmp.eq.s32.totalorder %s29, 0
      %p111 = por %p109, %p110
      %p112 = scmp.ne.s32.totalorder %s98, %s99
      %p113 = scmp.eq.s32.totalorder %s30, 1
      %p114 = por %p112, %p113
      %p116 = scmp.ne.s32.totalorder %s99, %s115
      %p117 = scmp.eq.s32.totalorder %s30, 0
      %p118 = por %p116, %p117
      %s119 = ssub.s32 %s31, %s43
      %p120 = scmp.eq.s32.totalorder %s119, 0
      %s122 = sadd.s32 %s121, 1
      %s123 = scalar_select %p120, %s121, %s122
      %p126 = pneg %p120
      %p127 = scmp.eq.s32.totalorder %s24, 1
      %p128 = por %p126, %p127
      %p129 = scmp.ne.s32.totalorder %s121, %s124
      %p130 = scmp.eq.s32.totalorder %s24, 0
      %p131 = por %p129, %p130
      %p132 = scmp.ne.s32.totalorder %s121, %s124
      %p133 = scmp.eq.s32.totalorder %s29, 1
      %p134 = por %p132, %p133
      %p135 = scmp.ne.s32.totalorder %s124, %s125
      %p136 = scmp.eq.s32.totalorder %s29, 0
      %p137 = por %p135, %p136
      %p138 = scmp.ne.s32.totalorder %s124, %s125
      %p139 = scmp.eq.s32.totalorder %s30, 1
      %p140 = por %p138, %p139
      %p142 = scmp.ne.s32.totalorder %s125, %s141
      %p143 = scmp.eq.s32.totalorder %s30, 0
      %p144 = por %p142, %p143
      %s146 = sadd.s32 %s145, 1
      %p149 = scmp.eq.s32.totalorder %s24, 1
      %p150 = scmp.ne.s32.totalorder %s145, %s147
      %p151 = scmp.eq.s32.totalorder %s24, 0
      %p152 = por %p150, %p151
      %p153 = scmp.ne.s32.totalorder %s145, %s147
      %p154 = scmp.eq.s32.totalorder %s29, 1
      %p155 = por %p153, %p154
      %p156 = scmp.ne.s32.totalorder %s147, %s148
      %p157 = scmp.eq.s32.totalorder %s29, 0
      %p158 = por %p156, %p157
      %p159 = scmp.ne.s32.totalorder %s147, %s148
      %p160 = scmp.eq.s32.totalorder %s30, 1
      %p161 = por %p159, %p160
      %p163 = scmp.ne.s32.totalorder %s148, %s162
      %p164 = scmp.eq.s32.totalorder %s30, 0
      %p165 = por %p163, %p164
      %s167 = sadd.s32 %s166, 1
      %p170 = scmp.eq.s32.totalorder %s24, 1
      %p171 = scmp.ne.s32.totalorder %s166, %s168
      %p172 = scmp.eq.s32.totalorder %s24, 0
      %p173 = por %p171, %p172
      %p174 = scmp.ne.s32.totalorder %s166, %s168
      %p175 = scmp.eq.s32.totalorder %s29, 1
      %p176 = por %p174, %p175
      %p177 = scmp.ne.s32.totalorder %s168, %s169
      %p178 = scmp.eq.s32.totalorder %s29, 0
      %p179 = por %p177, %p178
      %p180 = scmp.ne.s32.totalorder %s168, %s169
      %p181 = scmp.eq.s32.totalorder %s30, 1
      %p182 = por %p180, %p181
      %p184 = scmp.ne.s32.totalorder %s169, %s183
      %p185 = scmp.eq.s32.totalorder %s30, 0
      %p186 = por %p184, %p185
      %s188 = sadd.s32 %s187, 1
      %p191 = scmp.eq.s32.totalorder %s24, 1
      %p192 = scmp.ne.s32.totalorder %s187, %s189
      %p193 = scmp.eq.s32.totalorder %s24, 0
      %p194 = por %p192, %p193
      %p195 = scmp.ne.s32.totalorder %s187, %s189
      %p196 = scmp.eq.s32.totalorder %s29, 1
      %p197 = por %p195, %p196
      %p198 = scmp.ne.s32.totalorder %s189, %s190
      %p199 = scmp.eq.s32.totalorder %s29, 0
      %p200 = por %p198, %p199
      %p201 = scmp.ne.s32.totalorder %s189, %s190
      %p202 = scmp.eq.s32.totalorder %s30, 1
      %p203 = por %p201, %p202
      %p205 = scmp.ne.s32.totalorder %s190, %s204
      %p206 = scmp.eq.s32.totalorder %s30, 0
      %p207 = por %p205, %p206
      %s209 = sadd.s32 %s208, 1
      %p212 = scmp.eq.s32.totalorder %s24, 1
      %p213 = scmp.ne.s32.totalorder %s208, %s210
      %p214 = scmp.eq.s32.totalorder %s24, 0
      %p215 = por %p213, %p214
      %p216 = scmp.ne.s32.totalorder %s208, %s210
      %p217 = scmp.eq.s32.totalorder %s29, 1
      %p218 = por %p216, %p217
      %p219 = scmp.ne.s32.totalorder %s210, %s211
      %p220 = scmp.eq.s32.totalorder %s29, 0
      %p221 = por %p219, %p220
      %p222 = scmp.ne.s32.totalorder %s210, %s211
      %p223 = scmp.eq.s32.totalorder %s30, 1
      %p224 = por %p222, %p223
      %p226 = scmp.ne.s32.totalorder %s211, %s225
      %p227 = scmp.eq.s32.totalorder %s30, 0
      %p228 = por %p226, %p227
      %s230 = sadd.s32 %s229, 1
      %p233 = scmp.eq.s32.totalorder %s24, 1
      %p234 = scmp.ne.s32.totalorder %s229, %s231
      %p235 = scmp.eq.s32.totalorder %s24, 0
      %p236 = por %p234, %p235
      %p237 = scmp.ne.s32.totalorder %s229, %s231
      %p238 = scmp.eq.s32.totalorder %s29, 1
      %p239 = por %p237, %p238
      %p240 = scmp.ne.s32.totalorder %s231, %s232
      %p241 = scmp.eq.s32.totalorder %s29, 0
      %p242 = por %p240, %p241
      %p243 = scmp.ne.s32.totalorder %s231, %s232
      %p244 = scmp.eq.s32.totalorder %s30, 1
      %p245 = por %p243, %p244
      %p247 = scmp.ne.s32.totalorder %s232, %s246
      %p248 = scmp.eq.s32.totalorder %s30, 0
      %p249 = por %p247, %p248
      %s251 = sadd.s32 %s250, 1
      %p254 = scmp.eq.s32.totalorder %s24, 1
      %p255 = scmp.ne.s32.totalorder %s250, %s252
      %p256 = scmp.eq.s32.totalorder %s24, 0
      %p257 = por %p255, %p256
      %p258 = scmp.ne.s32.totalorder %s250, %s252
      %p259 = scmp.eq.s32.totalorder %s29, 1
      %p260 = por %p258, %p259
      %p261 = scmp.ne.s32.totalorder %s252, %s253
      %p262 = scmp.eq.s32.totalorder %s29, 0
      %p263 = por %p261, %p262
      %p264 = scmp.ne.s32.totalorder %s252, %s253
      %p265 = scmp.eq.s32.totalorder %s30, 1
      %p266 = por %p264, %p265
      %p268 = scmp.ne.s32.totalorder %s253, %s267
      %p269 = scmp.eq.s32.totalorder %s30, 0
      %p270 = por %p268, %p269
      %s271 = ssub.s32 %s31, %s43
      %p272 = scmp.eq.s32.totalorder %s271, 0
      %s274 = sadd.s32 %s273, 1
      %s275 = scalar_select %p272, %s273, %s274
      %p278 = pneg %p272
      %p279 = scmp.eq.s32.totalorder %s24, 1
      %p280 = por %p278, %p279
      %p281 = scmp.ne.s32.totalorder %s273, %s276
      %p282 = scmp.eq.s32.totalorder %s24, 0
      %p283 = por %p281, %p282
      %p284 = scmp.ne.s32.totalorder %s273, %s276
      %p285 = scmp.eq.s32.totalorder %s29, 1
      %p286 = por %p284, %p285
      %p287 = scmp.ne.s32.totalorder %s276, %s277
      %p288 = scmp.eq.s32.totalorder %s29, 0
      %p289 = por %p287, %p288
      %p290 = scmp.ne.s32.totalorder %s276, %s277
      %p291 = scmp.eq.s32.totalorder %s30, 1
      %p292 = por %p290, %p291
      %p294 = scmp.ne.s32.totalorder %s277, %s293
      %p295 = scmp.eq.s32.totalorder %s30, 0
      %p296 = por %p294, %p295
      %s297 = ssub.s32 %s31, %s43
      %p298 = scmp.eq.s32.totalorder %s297, 0
      %s300 = sadd.s32 %s299, 1
      %s301 = scalar_select %p298, %s299, %s300
      %p304 = pneg %p298
      %p305 = scmp.eq.s32.totalorder %s24, 1
      %p306 = por %p304, %p305
      %p307 = scmp.ne.s32.totalorder %s299, %s302
      %p308 = scmp.eq.s32.totalorder %s24, 0
      %p309 = por %p307, %p308
      %p310 = scmp.ne.s32.totalorder %s299, %s302
      %p311 = scmp.eq.s32.totalorder %s29, 1
      %p312 = por %p310, %p311
      %p313 = scmp.ne.s32.totalorder %s302, %s303
      %p314 = scmp.eq.s32.totalorder %s29, 0
      %p315 = por %p313, %p314
      %p316 = scmp.ne.s32.totalorder %s302, %s303
      %p317 = scmp.eq.s32.totalorder %s30, 1
      %p318 = por %p316, %p317
      %p320 = scmp.ne.s32.totalorder %s303, %s319
      %p321 = scmp.eq.s32.totalorder %s30, 0
      %p322 = por %p320, %p321
      %s323 = ssub.s32 %s31, %s43
      %p324 = scmp.eq.s32.totalorder %s323, 0
      %s326 = sadd.s32 %s325, 1
      %s327 = scalar_select %p324, %s325, %s326
      %p330 = pneg %p324
      %p331 = scmp.eq.s32.totalorder %s24, 1
      %p332 = por %p330, %p331
      %p333 = scmp.ne.s32.totalorder %s325, %s328
      %p334 = scmp.eq.s32.totalorder %s24, 0
      %p335 = por %p333, %p334
      %p336 = scmp.ne.s32.totalorder %s325, %s328
      %p337 = scmp.eq.s32.totalorder %s29, 1
      %p338 = por %p336, %p337
      %p339 = scmp.ne.s32.totalorder %s328, %s329
      %p340 = scmp.eq.s32.totalorder %s29, 0
      %p341 = por %p339, %p340
      %p342 = scmp.ne.s32.totalorder %s328, %s329
      %p343 = scmp.eq.s32.totalorder %s30, 1
      %p344 = por %p342, %p343
      %p346 = scmp.ne.s32.totalorder %s329, %s345
      %p347 = scmp.eq.s32.totalorder %s30, 0
      %p348 = por %p346, %p347
      %p349 = scmp.le.s32.totalorder 1, %s24
      %p350 = scmp.lt.s32.totalorder %s24, 3
      %p351 = pnand %p349, %p350
      %p352 = pneg %p351
      // Predicated region
      $region9: #{tpu_custom_call.1} parent=5 // pred_check
        _
      $region10: #{tpu_custom_call.1} parent=5 // pred_check_branch
        %354 = sbr.rel (%p351) target = $region12
      $region11: #{tpu_custom_call.1} parent=5 // pred_region
        %s355 = ssub.s32 %s24, 1
        // Predicated region
        $region13: #{tpu_custom_call.1} parent=11 // pred_check
          %p356 = pneg %p57
        $region14: #{tpu_custom_call.1} parent=11 // pred_check_branch
          %358 = sbr.rel (%p356) target = $region16
        $region15: #{tpu_custom_call.1} parent=11 // pred_region
          %s360 = ssub.s32 16, 16
          %361 = vsyncadd [#allocation6], %s360
          %s363 = sshll.u32 %s0, 4
          %s364 = int_to_ptr.vmem [resolvable:$true] %s363
          %366 = dma.vmem_to_smem %s364, 16, [#allocation3], [#allocation6]
        $region16: #{tpu_custom_call.1} parent=11 // pred_fallthru
          _
        // Predicated region
        $region17: #{tpu_custom_call.1} parent=11 // pred_check
          %p367 = pneg %p111
        $region18: #{tpu_custom_call.1} parent=11 // pred_check_branch
          %369 = sbr.rel (%p367) target = $region20
        $region19: #{tpu_custom_call.1} parent=11 // pred_region
          %p370 = scmp.lt.s32.totalorder %s33, 0
          %s371 = scalar_select %p370, %s33, 0
          %s372 = smul.addr %s371, 2
          %s373 = scalar_lea.vmem %s2, %s372
        $region20: #{tpu_custom_call.1} parent=11 // pred_fallthru
          _
        // Predicated region
        $region21: #{tpu_custom_call.1} parent=11 // pred_check
          %p374 = pneg %p137
        $region22: #{tpu_custom_call.1} parent=11 // pred_check_branch
          %376 = sbr.rel (%p374) target = $region24
        $region23: #{tpu_custom_call.1} parent=11 // pred_region
          %p377 = scmp.lt.s32.totalorder %s33, 0
          %s378 = scalar_select %p377, %s33, 0
          %s379 = smul.addr %s378, 2
          %s380 = scalar_lea.vmem %s3, %s379
        $region24: #{tpu_custom_call.1} parent=11 // pred_fallthru
          _
        // Predicated region
        $region25: #{tpu_custom_call.1} parent=11 // pred_check
          %p381 = pneg %p158
        $region26: #{tpu_custom_call.1} parent=11 // pred_check_branch
          %383 = sbr.rel (%p381) target = $region28
        $region27: #{tpu_custom_call.1} parent=11 // pred_region
          _
        $region28: #{tpu_custom_call.1} parent=11 // pred_fallthru
          _
        // Predicated region
        $region29: #{tpu_custom_call.1} parent=11 // pred_check
          %p384 = pneg %p179
        $region30: #{tpu_custom_call.1} parent=11 // pred_check_branch
          %386 = sbr.rel (%p384) target = $region32
        $region31: #{tpu_custom_call.1} parent=11 // pred_region
          _
        $region32: #{tpu_custom_call.1} parent=11 // pred_fallthru
          _
        // Predicated region
        $region33: #{tpu_custom_call.1} parent=11 // pred_check
          %p387 = pneg %p200
        $region34: #{tpu_custom_call.1} parent=11 // pred_check_branch
          %389 = sbr.rel (%p387) target = $region36
        $region35: #{tpu_custom_call.1} parent=11 // pred_region
          %s391 = ssub.s32 2048, 2048
          %392 = vsyncadd [#allocation4], %s391
          %s393 = sshll.u32 [#allocation8], 4
          %s394 = int_to_ptr.vmem [resolvable:$true] %s393
          %399 = dma.hbm_to_vmem [thread:$0]  %s6, 2048, %s394, [#allocation4], 128, 128, 8
        $region36: #{tpu_custom_call.1} parent=11 // pred_fallthru
          _
        // Predicated region
        $region37: #{tpu_custom_call.1} parent=11 // pred_check
          %p400 = pneg %p221
        $region38: #{tpu_custom_call.1} parent=11 // pred_check_branch
          %402 = sbr.rel (%p400) target = $region40
        $region39: #{tpu_custom_call.1} parent=11 // pred_region
          _
        $region40: #{tpu_custom_call.1} parent=11 // pred_fallthru
          _
        // Predicated region
        $region41: #{tpu_custom_call.1} parent=11 // pred_check
          %p403 = pneg %p242
        $region42: #{tpu_custom_call.1} parent=11 // pred_check_branch
          %405 = sbr.rel (%p403) target = $region44
        $region43: #{tpu_custom_call.1} parent=11 // pred_region
          %s407 = ssub.s32 2048, 2048
          %408 = vsyncadd [#allocation10], %s407
          %s409 = sshll.u32 [#allocation9], 4
          %s410 = int_to_ptr.vmem [resolvable:$true] %s409
          %415 = dma.hbm_to_vmem [thread:$0]  %s8, 2048, %s410, [#allocation10], 128, 128, 8
        $region44: #{tpu_custom_call.1} parent=11 // pred_fallthru
          _
        // Predicated region
        $region45: #{tpu_custom_call.1} parent=11 // pred_check
          %p416 = pneg %p263
        $region46: #{tpu_custom_call.1} parent=11 // pred_check_branch
          %418 = sbr.rel (%p416) target = $region48
        $region47: #{tpu_custom_call.1} parent=11 // pred_region
          _
        $region48: #{tpu_custom_call.1} parent=11 // pred_fallthru
          _
        // Predicated region
        $region49: #{tpu_custom_call.1} parent=11 // pred_check
          %p419 = pneg %p289
        $region50: #{tpu_custom_call.1} parent=11 // pred_check_branch
          %421 = sbr.rel (%p419) target = $region52
        $region51: #{tpu_custom_call.1} parent=11 // pred_region
          %p422 = scmp.lt.s32.totalorder %s33, 0
          %s423 = scalar_select %p422, %s33, 0
          %s424 = smul.addr %s423, 2
          %s425 = scalar_lea.vmem %s10, %s424
        $region52: #{tpu_custom_call.1} parent=11 // pred_fallthru
          _
      $region12: #{tpu_custom_call.1} parent=5 // pred_fallthru
        _
      %p426 = scmp.lt.s32.totalorder %s24, 2
      // Predicated region
      $region53: #{tpu_custom_call.1} parent=5 // pred_check
        %p427 = pneg %p426
      $region54: #{tpu_custom_call.1} parent=5 // pred_check_branch
        %429 = sbr.rel (%p427) target = $region56
      $region55: #{tpu_custom_call.1} parent=5 // pred_region
        // Predicated region
        $region57: #{tpu_custom_call.1} parent=55 // pred_check
          %p430 = pneg %p79
        $region58: #{tpu_custom_call.1} parent=55 // pred_check_branch
          %432 = sbr.rel (%p430) target = $region60
        $region59: #{tpu_custom_call.1} parent=55 // pred_region
          %s433 = sand.u32 %s69, 1
          %s434 = sand.u32 %s69, 1
          %s435 = smul.addr %s434, 16
          %s436 = scalar_lea.vmem [#allocation7], %s435
          %s437 = smul.u32 2, %s31
          %s438 = smul.addr %s437, 2
          %s439 = sadd.s32 %s32, %s438
          %s440 = smul.addr %s439, 8
          %s441 = scalar_lea.vmem %s1, %s440
          // Predicated region
          $region61: #{tpu_custom_call.1} parent=59 // pred_check
            _
          $region62: #{tpu_custom_call.1} parent=59 // pred_check_branch
            %443 = sbr.rel (0) target = $region64
          $region63: #{tpu_custom_call.1} parent=59 // pred_region
            // Predicated region
            $region65: #{tpu_custom_call.1} parent=63 // pred_check
              _
            $region66: #{tpu_custom_call.1} parent=63 // pred_check_branch
              %445 = sbr.rel (0) target = $region68
            $region67: #{tpu_custom_call.1} parent=63 // pred_region
              // Predicated region
              $region80: #{tpu_custom_call.1} parent=67 // pred_check
                _
              $region81: #{tpu_custom_call.1} parent=67 // pred_check_branch
                %462 = sbr.rel (0) target = $region83
              $region82: #{tpu_custom_call.1} parent=67 // pred_region
                loop: start=0, step=1, limit=1
                $region84: #{tpu_custom_call.1} parent=82 // loop_pre_header
                  _
                $region85: #{tpu_custom_call.1} parent=82 // loop_header
                  %s464 = sphi 0, %s468
                  %p465 = scmp.ge.s32.totalorder %s464, 1
                  %s469 = sphi %s441, %s441
                  %s470 = sphi %s436, %s436
                $region86: #{tpu_custom_call.1} parent=82 // loop_header_branch
                  %467 = sbr.rel (%p465) target = $region90
                $region87: #{tpu_custom_call.1} parent=82 // loop_body
                  %v471 = vld [vmem:[%s469] sm:$0xff]
                  %472 = vst [vmem:[%s470] sm:$0xff] %v471
                  %v473 = vld [vmem:[%s469 + $0x10] sm:$0xff]
                  %474 = vst [vmem:[%s470 + $0x8] sm:$0xff] %v473
                $region88: #{tpu_custom_call.1} parent=82 // loop_footer
                  %s468 = sadd.s32 1, %s464
                $region89: #{tpu_custom_call.1} parent=82 // loop_footer_branch
                  %463 = sbr.rel target = $region85
                $region90: #{tpu_custom_call.1} parent=82 // loop_exit
                  _
              $region83: #{tpu_custom_call.1} parent=67 // pred_fallthru
                _
              // Predicated region
              $region91: #{tpu_custom_call.1} parent=67 // pred_check
                _
              $region92: #{tpu_custom_call.1} parent=67 // pred_check_branch
                %476 = sbr.rel target = $region94
              $region93: #{tpu_custom_call.1} parent=67 // pred_region
                _
              $region94: #{tpu_custom_call.1} parent=67 // pred_fallthru
                _
            $region68: #{tpu_custom_call.1} parent=63 // pred_fallthru
              _
            // Predicated region
            $region69: #{tpu_custom_call.1} parent=63 // pred_check
              _
            $region70: #{tpu_custom_call.1} parent=63 // pred_check_branch
              %447 = sbr.rel target = $region72
            $region71: #{tpu_custom_call.1} parent=63 // pred_region
              loop: start=0, step=1, limit=1
              $region73: #{tpu_custom_call.1} parent=71 // loop_pre_header
                _
              $region74: #{tpu_custom_call.1} parent=71 // loop_header
                %s450 = sphi 0, %s454
                %p451 = scmp.ge.s32.totalorder %s450, 1
                %s455 = sphi %s441, %s441
                %s456 = sphi %s436, %s436
              $region75: #{tpu_custom_call.1} parent=71 // loop_header_branch
                %453 = sbr.rel (%p451) target = $region79
              $region76: #{tpu_custom_call.1} parent=71 // loop_body
                %v457 = vld [vmem:[%s455] sm:$0xff]
                %458 = vst [vmem:[%s456] sm:$0xff] %v457
                %v459 = vld [vmem:[%s455 + $0x10] sm:$0xff]
                %460 = vst [vmem:[%s456 + $0x8] sm:$0xff] %v459
              $region77: #{tpu_custom_call.1} parent=71 // loop_footer
                %s454 = sadd.s32 1, %s450
              $region78: #{tpu_custom_call.1} parent=71 // loop_footer_branch
                %449 = sbr.rel target = $region74
              $region79: #{tpu_custom_call.1} parent=71 // loop_exit
                _
            $region72: #{tpu_custom_call.1} parent=63 // pred_fallthru
              _
          $region64: #{tpu_custom_call.1} parent=59 // pred_fallthru
            _
          %477 = vnop
        $region60: #{tpu_custom_call.1} parent=55 // pred_fallthru
          _
      $region56: #{tpu_custom_call.1} parent=5 // pred_fallthru
        _
      %p478 = scmp.le.s32.totalorder 1, %s24
      %p479 = scmp.lt.s32.totalorder %s24, 3
      %p480 = pnand %p478, %p479
      %p481 = pneg %p480
      // Predicated region
      $region95: #{tpu_custom_call.1} parent=5 // pred_check
        _
      $region96: #{tpu_custom_call.1} parent=5 // pred_check_branch
        %483 = sbr.rel (%p480) target = $region98
      $region97: #{tpu_custom_call.1} parent=5 // pred_region
        %s484 = ssub.s32 %s24, 1
        // Predicated region
        $region99: #{tpu_custom_call.1} parent=97 // pred_check
          %p485 = pneg %p57
        $region100: #{tpu_custom_call.1} parent=97 // pred_check_branch
          %487 = sbr.rel (%p485) target = $region102
        $region101: #{tpu_custom_call.1} parent=97 // pred_region
          %488 = dma.done [#allocation6], 16
        $region102: #{tpu_custom_call.1} parent=97 // pred_fallthru
          _
        %s489 = sand.u32 %s72, 1
        %s490 = sand.u32 %s72, 1
        %s491 = smul.addr %s490, 16
        %s492 = scalar_lea.vmem [#allocation7], %s491
        // Predicated region
        $region103: #{tpu_custom_call.1} parent=97 // pred_check
          %p493 = pneg %p85
        $region104: #{tpu_custom_call.1} parent=97 // pred_check_branch
          %495 = sbr.rel (%p493) target = $region106
        $region105: #{tpu_custom_call.1} parent=97 // pred_region
          _
        $region106: #{tpu_custom_call.1} parent=97 // pred_fallthru
          _
        // Predicated region
        $region107: #{tpu_custom_call.1} parent=97 // pred_check
          %p496 = pneg %p200
        $region108: #{tpu_custom_call.1} parent=97 // pred_check_branch
          %498 = sbr.rel (%p496) target = $region110
        $region109: #{tpu_custom_call.1} parent=97 // pred_region
          %499 = dma.done [#allocation4], 2048
        $region110: #{tpu_custom_call.1} parent=97 // pred_fallthru
          _
        // Predicated region
        $region111: #{tpu_custom_call.1} parent=97 // pred_check
          %p500 = pneg %p242
        $region112: #{tpu_custom_call.1} parent=97 // pred_check_branch
          %502 = sbr.rel (%p500) target = $region114
        $region113: #{tpu_custom_call.1} parent=97 // pred_region
          %503 = dma.done [#allocation10], 2048
        $region114: #{tpu_custom_call.1} parent=97 // pred_fallthru
          _
        %504 = sfence
        %p505 = pneg %p57
        %p506 = pneg %p54
        %s507 = sand.u32 %s72, 1
        %s508 = sand.u32 %s72, 1
        %s509 = smul.addr %s508, 16
        %s510 = scalar_lea.vmem [#allocation7], %s509
        %p511 = pneg %p85
        %p512 = pneg %p82
        %p513 = scmp.lt.s32.totalorder %s33, 0
        %s514 = scalar_select %p513, %s33, 0
        %s515 = smul.addr %s514, 2
        %s516 = scalar_lea.vmem %s2, %s515
        %p517 = pneg %p111
        %p518 = pneg %p108
        %p519 = scmp.lt.s32.totalorder %s33, 0
        %s520 = scalar_select %p519, %s33, 0
        %s521 = smul.addr %s520, 2
        %s522 = scalar_lea.vmem %s3, %s521
        %p523 = pneg %p137
        %p524 = pneg %p134
        %p525 = pneg %p158
        %p526 = pneg %p155
        %p527 = pneg %p179
        %p528 = pneg %p176
        %p529 = pneg %p200
        %p530 = pneg %p197
        %p531 = pneg %p221
        %p532 = pneg %p218
        %p533 = pneg %p242
        %p534 = pneg %p239
        %p535 = pneg %p263
        %p536 = pneg %p260
        %p537 = scmp.lt.s32.totalorder %s33, 0
        %s538 = scalar_select %p537, %s33, 0
        %s539 = smul.addr %s538, 2
        %s540 = scalar_lea.vmem %s10, %s539
        %p541 = pneg %p289
        %p542 = pneg %p286
        %p543 = pneg %p315
        %p544 = pneg %p312
        %p545 = pneg %p341
        %p546 = pneg %p338
        %s547 = smul.u32 2, %s33
        %p548 = scmp.lt.s32.totalorder %s33, 0
        %s549 = scalar_select %p548, %s33, 0
        %s550 = smul.addr %s549, 2
        %s551 = scalar_lea.vmem %s2, %s550
        %p552 = scmp.lt.s32.totalorder %s33, 0
        %s553 = scalar_select %p552, %s33, 0
        %s554 = smul.addr %s553, 2
        %s555 = scalar_lea.vmem %s3, %s554
        %p556 = scmp.lt.s32.totalorder %s33, 0
        %s557 = scalar_select %p556, %s33, 0
        %s558 = smul.addr %s557, 2
        %s559 = scalar_lea.vmem %s10, %s558
        %p560 = scmp.eq.s32.totalorder %s34, 0
        // Predicated region
        $region115: #{tpu_custom_call.1} parent=97 // pred_check
          %p561 = pneg %p560
        $region116: #{tpu_custom_call.1} parent=97 // pred_check_branch
          %563 = sbr.rel (%p561) target = $region118
        $region117: #{tpu_custom_call.1} parent=97 // pred_region
          %vm564 = vcmask 254976
          %565 = vst.msk [vmem:[#allocation2] sm:$0x3] %vm564, 0.0
        $region118: #{tpu_custom_call.1} parent=97 // pred_fallthru
          _
        %s566 = smul.u32 %s34, 8
        %v567 = vlaneseq
        %v568 = vshrl.u32 %v567, 7
        %v569 = vstv %s566
        %v570 = vadd.s32 %v569, %v568
        %s571 = smul.u32 %s33, 2
        %s572 = sld [smem:[#allocation3 + %s571]]
        %v573 = vstv %s572
        %vm574 = vcmp.lt.s32.totalorder %v570, %v573
        %v575 = vld [vmem:[%s492] sm:$0xff]
        %v576 = vsel %vm574, 1, 0
        %vm577 = vcmp.eq.s32.totalorder %v576, 1
        %v578 = vsel %vm577, %v575, 0.0
        %v579 = vld [vmem:[#allocation2] sm:$0x1]
        %vm580 = vcmask 261120
        %v581 = vsel %vm580, %v578, 0.0
        %v582 = vrot.slane %v581, 4
        %v583 = vadd.f32 %v581, %v582
        %v584 = vrot.slane %v583, 2
        %v585 = vadd.f32 %v583, %v584
        %v586 = vrot.slane %v585, 1
        %v587 = vadd.f32 %v585, %v586
        %v588 = vadd.f32 %v579, %v587
        %vm589 = vcmask 253952
        %590 = vst.msk [vmem:[#allocation2] sm:$0x1] %vm589, %v588
        %s591 = sadd.s32 %s571, 1
        %s592 = sld [smem:[#allocation3 + %s591]]
        %v593 = vstv %s592
        %vm594 = vcmp.lt.s32.totalorder %v570, %v593
        %s595 = scalar_lea.vmem %s492, 8 [#allocation7]
        %v596 = vld [vmem:[%s595] sm:$0xff]
        %v597 = vsel %vm594, 1, 0
        %vm598 = vcmp.eq.s32.totalorder %v597, 1
        %v599 = vsel %vm598, %v596, 0.0
        %v600 = vld [vmem:[#allocation2 + $0x1] sm:$0x1]
        %v601 = vsel %vm580, %v599, 0.0
        %v602 = vrot.slane %v601, 4
        %v603 = vadd.f32 %v601, %v602
        %v604 = vrot.slane %v603, 2
        %v605 = vadd.f32 %v603, %v604
        %v606 = vrot.slane %v605, 1
        %v607 = vadd.f32 %v605, %v606
        %v608 = vadd.f32 %v600, %v607
        %609 = vst.msk [vmem:[#allocation2 + $0x1] sm:$0x1] %vm589, %v608
        %p610 = scmp.eq.s32.totalorder %s34, 1
        // Predicated region
        $region119: #{tpu_custom_call.1} parent=97 // pred_check
          %p611 = pneg %p610
        $region120: #{tpu_custom_call.1} parent=97 // pred_check_branch
          %613 = sbr.rel (%p611) target = $region122
        $region121: #{tpu_custom_call.1} parent=97 // pred_region
          %v614 = vld [vmem:[#allocation2] sm:$0x3]
          %v615 = vld [vmem:[%s551] sm:$0x3]
          %617 = vset.pattern.permute.xlu0 0
          %618 = vperm.xlu0 %617, %v615
          %v619 = vpop.permute.xlu0 %618
          %v621 = vmul.f32 %v614, %v619
          %v622 = vld [vmem:[%s4] sm:$0xff]
          %v623 = vld [vmem:[%s4 + $0x8] sm:$0xff]
          %v624 = vld [vmem:[%s4 + $0x10] sm:$0xff]
          %v625 = vld [vmem:[%s4 + $0x18] sm:$0xff]
          %v626 = vld [vmem:[%s5] sm:$0x1]
          %v628 = vlaneseq
          %v629 = vshrl.u32 %v628, 7
          %v630 = vsub.s32 0, %v629
          %v631 = vrot.slane %v626, %v630
          %v634 = vsel %vm580, %v621, 0
          %636 = vmatprep.subr.mxu0 0.0
          %637 = vmatpush1.msra.mxu0 %v622
          %638 = vmatprep.subr.mxu0 0.0
          %639 = vmatpush1.msra.mxu0 %v623
          %640 = vmatprep.subr.mxu0 0.0
          %641 = vmatpush1.msra.mxu0 %v624
          %642 = vmatprep.subr.mxu0 0.0
          %643 = vmatpush1.msra.mxu0 %v625
          %644 = vmatprep.subr.mxu0 0.0
          %645 = vmatpush1.msra.mxu0 0.0
          %646 = vmatprep.subr.mxu0 0.0
          %647 = vmatpush1.msra.mxu0 0.0
          %648 = vmatprep.subr.mxu0 0.0
          %649 = vmatpush1.msra.mxu0 0.0
          %650 = vmatprep.subr.mxu0 0.0
          %651 = vmatpush1.msra.mxu0 0.0
          %652 = vmatprep.subr.mxu0 0.0
          %653 = vmatpush1.msra.mxu0 0.0
          %654 = vmatprep.subr.mxu0 0.0
          %655 = vmatpush1.msra.mxu0 0.0
          %656 = vmatprep.subr.mxu0 0.0
          %657 = vmatpush1.msra.mxu0 0.0
          %658 = vmatprep.subr.mxu0 0.0
          %659 = vmatpush1.msra.mxu0 0.0
          %660 = vmatprep.subr.mxu0 0.0
          %661 = vmatpush1.msra.mxu0 0.0
          %662 = vmatprep.subr.mxu0 0.0
          %663 = vmatpush1.msra.mxu0 0.0
          %664 = vmatprep.subr.mxu0 0.0
          %665 = vmatpush1.msra.mxu0 0.0
          %666 = vmatprep.subr.mxu0 0.0
          %667 = vmatpush1.msra.mxu0 0.0
          %668 = vmatprep.subr.mxu0 0.0
          %669 = vmatpush1.msra.mxu0 0.0
          %670 = vmatprep.subr.mxu0 0.0
          %671 = vmatpush1.msra.mxu0 0.0
          %672 = vmatprep.subr.mxu0 0.0
          %673 = vmatpush1.msra.mxu0 0.0
          %674 = vmatprep.subr.mxu0 0.0
          %675 = vmatpush1.msra.mxu0 0.0
          %676 = vmatprep.subr.mxu0 0.0
          %677 = vmatpush1.msra.mxu0 0.0
          %678 = vmatprep.subr.mxu0 0.0
          %679 = vmatpush1.msra.mxu0 0.0
          %680 = vmatprep.subr.mxu0 0.0
          %681 = vmatpush1.msra.mxu0 0.0
          %682 = vmatprep.subr.mxu0 0.0
          %683 = vmatpush1.msra.mxu0 0.0
          %684 = vmatprep.subr.mxu0 0.0
          %685 = vmatpush1.msra.mxu0 0.0
          %686 = vmatprep.subr.mxu0 0.0
          %687 = vmatpush1.msra.mxu0 0.0
          %688 = vmatprep.subr.mxu0 0.0
          %689 = vmatpush1.msra.mxu0 0.0
          %690 = vmatprep.subr.mxu0 0.0
          %691 = vmatpush1.msra.mxu0 0.0
          %692 = vmatprep.subr.mxu0 0.0
          %693 = vmatpush1.msra.mxu0 0.0
          %694 = vmatprep.subr.mxu0 0.0
          %695 = vmatpush1.msra.mxu0 0.0
          %696 = vmatprep.subr.mxu0 0.0
          %697 = vmatpush1.msra.mxu0 0.0
          %698 = vmatprep.subr.mxu0 0.0
          %699 = vmatpush1.msra.mxu0 0.0
          %700 = vmatprep.mubr.f32.mxu0 0.0
          %701 = vmatmul.mubr.f32.gmra.mrb[0].mxu0 %v634
          %v702 = vpop.f32.mrb[0].mxu0
          %v703 = vadd.f32 %v631, %v702
          %v704 = vpop.f32.mrb[0].mxu0
          %705 = vdwg.mxu0
          %v706 = vld [vmem:[#allocation8] sm:$0xff]
          %v707 = vld [vmem:[#allocation8 + $0x8] sm:$0xff]
          %v708 = vld [vmem:[#allocation8 + $0x10] sm:$0xff]
          %v709 = vld [vmem:[#allocation8 + $0x18] sm:$0xff]
          %v710 = vld [vmem:[#allocation8 + $0x20] sm:$0xff]
          %v711 = vld [vmem:[#allocation8 + $0x28] sm:$0xff]
          %v712 = vld [vmem:[#allocation8 + $0x30] sm:$0xff]
          %v713 = vld [vmem:[#allocation8 + $0x38] sm:$0xff]
          %v714 = vld [vmem:[#allocation8 + $0x40] sm:$0xff]
          %v715 = vld [vmem:[#allocation8 + $0x48] sm:$0xff]
          %v716 = vld [vmem:[#allocation8 + $0x50] sm:$0xff]
          %v717 = vld [vmem:[#allocation8 + $0x58] sm:$0xff]
          %v718 = vld [vmem:[#allocation8 + $0x60] sm:$0xff]
          %v719 = vld [vmem:[#allocation8 + $0x68] sm:$0xff]
          %v720 = vld [vmem:[#allocation8 + $0x70] sm:$0xff]
          %v721 = vld [vmem:[#allocation8 + $0x78] sm:$0xff]
          %v722 = vld [vmem:[%s7] sm:$0x1]
          %v724 = vlaneseq
          %v725 = vshrl.u32 %v724, 7
          %v726 = vsub.s32 0, %v725
          %v727 = vrot.slane %v722, %v726
          %729 = vmatprep.subr.mxu0 0.0
          %730 = vmatpush1.msra.mxu0 %v706
          %731 = vmatprep.subr.mxu0 0.0
          %732 = vmatpush1.msra.mxu0 %v707
          %733 = vmatprep.subr.mxu0 0.0
          %734 = vmatpush1.msra.mxu0 %v708
          %735 = vmatprep.subr.mxu0 0.0
          %736 = vmatpush1.msra.mxu0 %v709
          %737 = vmatprep.subr.mxu0 0.0
          %738 = vmatpush1.msra.mxu0 %v710
          %739 = vmatprep.subr.mxu0 0.0
          %740 = vmatpush1.msra.mxu0 %v711
          %741 = vmatprep.subr.mxu0 0.0
          %742 = vmatpush1.msra.mxu0 %v712
          %743 = vmatprep.subr.mxu0 0.0
          %744 = vmatpush1.msra.mxu0 %v713
          %745 = vmatprep.subr.mxu0 0.0
          %746 = vmatpush1.msra.mxu0 %v714
          %747 = vmatprep.subr.mxu0 0.0
          %748 = vmatpush1.msra.mxu0 %v715
          %749 = vmatprep.subr.mxu0 0.0
          %750 = vmatpush1.msra.mxu0 %v716
          %751 = vmatprep.subr.mxu0 0.0
          %752 = vmatpush1.msra.mxu0 %v717
          %753 = vmatprep.subr.mxu0 0.0
          %754 = vmatpush1.msra.mxu0 %v718
          %755 = vmatprep.subr.mxu0 0.0
          %756 = vmatpush1.msra.mxu0 %v719
          %757 = vmatprep.subr.mxu0 0.0
          %758 = vmatpush1.msra.mxu0 %v720
          %759 = vmatprep.subr.mxu0 0.0
          %760 = vmatpush1.msra.mxu0 %v721
          %761 = vmatprep.subr.mxu0 0.0
          %762 = vmatpush1.msra.mxu0 0.0
          %763 = vmatprep.subr.mxu0 0.0
          %764 = vmatpush1.msra.mxu0 0.0
          %765 = vmatprep.subr.mxu0 0.0
          %766 = vmatpush1.msra.mxu0 0.0
          %767 = vmatprep.subr.mxu0 0.0
          %768 = vmatpush1.msra.mxu0 0.0
          %769 = vmatprep.subr.mxu0 0.0
          %770 = vmatpush1.msra.mxu0 0.0
          %771 = vmatprep.subr.mxu0 0.0
          %772 = vmatpush1.msra.mxu0 0.0
          %773 = vmatprep.subr.mxu0 0.0
          %774 = vmatpush1.msra.mxu0 0.0
          %775 = vmatprep.subr.mxu0 0.0
          %776 = vmatpush1.msra.mxu0 0.0
          %777 = vmatprep.subr.mxu0 0.0
          %778 = vmatpush1.msra.mxu0 0.0
          %779 = vmatprep.subr.mxu0 0.0
          %780 = vmatpush1.msra.mxu0 0.0
          %781 = vmatprep.subr.mxu0 0.0
          %782 = vmatpush1.msra.mxu0 0.0
          %783 = vmatprep.subr.mxu0 0.0
          %784 = vmatpush1.msra.mxu0 0.0
          %785 = vmatprep.subr.mxu0 0.0
          %786 = vmatpush1.msra.mxu0 0.0
          %787 = vmatprep.subr.mxu0 0.0
          %788 = vmatpush1.msra.mxu0 0.0
          %789 = vmatprep.subr.mxu0 0.0
          %790 = vmatpush1.msra.mxu0 0.0
          %791 = vmatprep.subr.mxu0 0.0
          %792 = vmatpush1.msra.mxu0 0.0
          %793 = vmatprep.mubr.f32.mxu0 0.0
          %794 = vmatmul.mubr.f32.gmra.mrb[0].mxu0 %v703
          %v795 = vpop.f32.mrb[0].mxu0
          %v796 = vadd.f32 %v727, %v795
          %v797 = vpop.f32.mrb[0].mxu0
          %798 = vdwg.mxu0
          %v799 = vsub.f32 0.0, %v796
          %v800 = vmul.f32 %v799, 1.442695
          %v801 = vpow.pop %v800
          %v802 = vadd.f32 %v801, 1.0
          %v803 = vrcp.pop %v802
          %v804 = vmul.f32 1.0, %v803
          %805 = vst [vmem:[#allocation11] sm:$0x3] %v804
          %v806 = vld [vmem:[#allocation9] sm:$0xff]
          %v807 = vld [vmem:[#allocation9 + $0x8] sm:$0xff]
          %v808 = vld [vmem:[#allocation9 + $0x10] sm:$0xff]
          %v809 = vld [vmem:[#allocation9 + $0x18] sm:$0xff]
          %v810 = vld [vmem:[#allocation9 + $0x20] sm:$0xff]
          %v811 = vld [vmem:[#allocation9 + $0x28] sm:$0xff]
          %v812 = vld [vmem:[#allocation9 + $0x30] sm:$0xff]
          %v813 = vld [vmem:[#allocation9 + $0x38] sm:$0xff]
          %v814 = vld [vmem:[#allocation9 + $0x40] sm:$0xff]
          %v815 = vld [vmem:[#allocation9 + $0x48] sm:$0xff]
          %v816 = vld [vmem:[#allocation9 + $0x50] sm:$0xff]
          %v817 = vld [vmem:[#allocation9 + $0x58] sm:$0xff]
          %v818 = vld [vmem:[#allocation9 + $0x60] sm:$0xff]
          %v819 = vld [vmem:[#allocation9 + $0x68] sm:$0xff]
          %v820 = vld [vmem:[#allocation9 + $0x70] sm:$0xff]
          %v821 = vld [vmem:[#allocation9 + $0x78] sm:$0xff]
          %v822 = vld [vmem:[%s9] sm:$0x1]
          %v824 = vlaneseq
          %v825 = vshrl.u32 %v824, 7
          %v826 = vsub.s32 0, %v825
          %v827 = vrot.slane %v822, %v826
          %829 = vmatprep.subr.mxu0 0.0
          %830 = vmatpush1.msra.mxu0 %v806
          %831 = vmatprep.subr.mxu0 0.0
          %832 = vmatpush1.msra.mxu0 %v807
          %833 = vmatprep.subr.mxu0 0.0
          %834 = vmatpush1.msra.mxu0 %v808
          %835 = vmatprep.subr.mxu0 0.0
          %836 = vmatpush1.msra.mxu0 %v809
          %837 = vmatprep.subr.mxu0 0.0
          %838 = vmatpush1.msra.mxu0 %v810
          %839 = vmatprep.subr.mxu0 0.0
          %840 = vmatpush1.msra.mxu0 %v811
          %841 = vmatprep.subr.mxu0 0.0
          %842 = vmatpush1.msra.mxu0 %v812
          %843 = vmatprep.subr.mxu0 0.0
          %844 = vmatpush1.msra.mxu0 %v813
          %845 = vmatprep.subr.mxu0 0.0
          %846 = vmatpush1.msra.mxu0 %v814
          %847 = vmatprep.subr.mxu0 0.0
          %848 = vmatpush1.msra.mxu0 %v815
          %849 = vmatprep.subr.mxu0 0.0
          %850 = vmatpush1.msra.mxu0 %v816
          %851 = vmatprep.subr.mxu0 0.0
          %852 = vmatpush1.msra.mxu0 %v817
          %853 = vmatprep.subr.mxu0 0.0
          %854 = vmatpush1.msra.mxu0 %v818
          %855 = vmatprep.subr.mxu0 0.0
          %856 = vmatpush1.msra.mxu0 %v819
          %857 = vmatprep.subr.mxu0 0.0
          %858 = vmatpush1.msra.mxu0 %v820
          %859 = vmatprep.subr.mxu0 0.0
          %860 = vmatpush1.msra.mxu0 %v821
          %861 = vmatprep.subr.mxu0 0.0
          %862 = vmatpush1.msra.mxu0 0.0
          %863 = vmatprep.subr.mxu0 0.0
          %864 = vmatpush1.msra.mxu0 0.0
          %865 = vmatprep.subr.mxu0 0.0
          %866 = vmatpush1.msra.mxu0 0.0
          %867 = vmatprep.subr.mxu0 0.0
          %868 = vmatpush1.msra.mxu0 0.0
          %869 = vmatprep.subr.mxu0 0.0
          %870 = vmatpush1.msra.mxu0 0.0
          %871 = vmatprep.subr.mxu0 0.0
          %872 = vmatpush1.msra.mxu0 0.0
          %873 = vmatprep.subr.mxu0 0.0
          %874 = vmatpush1.msra.mxu0 0.0
          %875 = vmatprep.subr.mxu0 0.0
          %876 = vmatpush1.msra.mxu0 0.0
          %877 = vmatprep.subr.mxu0 0.0
          %878 = vmatpush1.msra.mxu0 0.0
          %879 = vmatprep.subr.mxu0 0.0
          %880 = vmatpush1.msra.mxu0 0.0
          %881 = vmatprep.subr.mxu0 0.0
          %882 = vmatpush1.msra.mxu0 0.0
          %883 = vmatprep.subr.mxu0 0.0
          %884 = vmatpush1.msra.mxu0 0.0
          %885 = vmatprep.subr.mxu0 0.0
          %886 = vmatpush1.msra.mxu0 0.0
          %887 = vmatprep.subr.mxu0 0.0
          %888 = vmatpush1.msra.mxu0 0.0
          %889 = vmatprep.subr.mxu0 0.0
          %890 = vmatpush1.msra.mxu0 0.0
          %891 = vmatprep.subr.mxu0 0.0
          %892 = vmatpush1.msra.mxu0 0.0
          %893 = vmatprep.mubr.f32.mxu0 0.0
          %894 = vmatmul.mubr.f32.gmra.mrb[0].mxu0 %v703
          %v895 = vpop.f32.mrb[0].mxu0
          %v896 = vadd.f32 %v827, %v895
          %v897 = vpop.f32.mrb[0].mxu0
          %898 = vdwg.mxu0
          %v899 = vld [vmem:[%s559] sm:$0x3]
          %v900 = vlaneseq
          %v901 = vand.u32 %v900, 127
          %vm902 = vcmp.lt.s32.totalorder %v901, 10
          %v903 = vmax.f32 %v796, 0.0
          %v904 = vand.u32 2147483647, %v796
          %v905 = vsub.f32 0.0, %v904
          %v906 = vmul.f32 %v905, 1.442695
          %v907 = vpow.pop %v906
          %v908 = vadd.f32 %v907, 1.0
          %v909 = vlog2.pop %v908
          %v910 = vmul.f32 %v909, 0.6931472
          %v911 = vadd.f32 %v903, %v910
          %v912 = vmul.f32 %v899, %v796
          %v913 = vsub.f32 %v911, %v912
          %v914 = vsel %vm902, %v913, 0.0
          %vm915 = vcmask 1041408
          %v916 = vsel %vm915, %v914, 0.0
          %917 = vadd.xlane.f32.xlu0 %v916
          %v918 = vpop.xlane.xlu0 %917
          %v919 = vld [vmem:[%s555] sm:$0x3]
          %v920 = vsub.f32 %v896, %v919
          %v921 = vmul.f32 %v920, %v920
          %vm922 = vcmp.eq.s32.totalorder %v901, 0
          %vm923 = vcmp.eq.s32.totalorder %v901, 1
          %vm924 = vcmp.eq.s32.totalorder %v901, 2
          %926 = vset.pattern.permute.xlu0 0
          %927 = vperm.xlu0 %926, %v921
          %v928 = vpop.permute.xlu0 %927
          %v930 = vsel %vm924, %v928, 0.0
          %v931 = vsel %vm923, %v918, %v930
          %933 = vset.pattern.permute.xlu0 0
          %934 = vperm.xlu0 %933, %v896
          %v935 = vpop.permute.xlu0 %934
          %v937 = vsel %vm922, %v935, %v931
          %938 = vst [vmem:[#allocation12] sm:$0x3] %v937
        $region122: #{tpu_custom_call.1} parent=97 // pred_fallthru
          _
        // Predicated region
        $region123: #{tpu_custom_call.1} parent=97 // pred_check
          %p939 = pneg %p312
        $region124: #{tpu_custom_call.1} parent=97 // pred_check_branch
          %941 = sbr.rel (%p939) target = $region126
        $region125: #{tpu_custom_call.1} parent=97 // pred_region
          %s943 = ssub.s32 32, 32
          %944 = vsyncadd [#allocation5], %s943
          %s945 = smul.addr %s33, 32
          %s946 = scalar_lea.hbm %s11, %s945
          %s948 = sshll.u32 [#allocation11], 4
          %s949 = int_to_ptr.vmem [resolvable:$true] %s948
          %951 = dma.vmem_to_hbm [thread:$0]  %s949, 32, %s946, [#allocation5]
        $region126: #{tpu_custom_call.1} parent=97 // pred_fallthru
          _
        // Predicated region
        $region127: #{tpu_custom_call.1} parent=97 // pred_check
          %p952 = pneg %p338
        $region128: #{tpu_custom_call.1} parent=97 // pred_check_branch
          %954 = sbr.rel (%p952) target = $region130
        $region129: #{tpu_custom_call.1} parent=97 // pred_region
          %s956 = ssub.s32 32, 32
          %957 = vsyncadd [#allocation13], %s956
          %s958 = smul.addr %s33, 32
          %s959 = scalar_lea.hbm %s12, %s958
          %s961 = sshll.u32 [#allocation12], 4
          %s962 = int_to_ptr.vmem [resolvable:$true] %s961
          %964 = dma.vmem_to_hbm [thread:$0]  %s962, 32, %s959, [#allocation13]
        $region130: #{tpu_custom_call.1} parent=97 // pred_fallthru
          _
        // Predicated region
        $region131: #{tpu_custom_call.1} parent=97 // pred_check
          %p965 = pneg %p312
        $region132: #{tpu_custom_call.1} parent=97 // pred_check_branch
          %967 = sbr.rel (%p965) target = $region134
        $region133: #{tpu_custom_call.1} parent=97 // pred_region
          %968 = dma.done [#allocation5], 32
        $region134: #{tpu_custom_call.1} parent=97 // pred_fallthru
          _
        // Predicated region
        $region135: #{tpu_custom_call.1} parent=97 // pred_check
          %p969 = pneg %p338
        $region136: #{tpu_custom_call.1} parent=97 // pred_check_branch
          %971 = sbr.rel (%p969) target = $region138
        $region137: #{tpu_custom_call.1} parent=97 // pred_region
          %972 = dma.done [#allocation13], 32
        $region138: #{tpu_custom_call.1} parent=97 // pred_fallthru
          _
      $region98: #{tpu_custom_call.1} parent=5 // pred_fallthru
        _
      %p973 = scmp.le.s32.totalorder 2, %s24
      // Predicated region
      $region139: #{tpu_custom_call.1} parent=5 // pred_check
        %p974 = pneg %p973
      $region140: #{tpu_custom_call.1} parent=5 // pred_check_branch
        %976 = sbr.rel (%p974) target = $region142
      $region141: #{tpu_custom_call.1} parent=5 // pred_region
        %s977 = ssub.s32 %s24, 2
      $region142: #{tpu_custom_call.1} parent=5 // pred_fallthru
        _
    $region6: #{tpu_custom_call.1} parent=1 // loop_footer
      %s28 = sadd.s32 1, %s24
    $region7: #{tpu_custom_call.1} parent=1 // loop_footer_branch
      %23 = sbr.rel target = $region3
    $region8: #{tpu_custom_call.1} parent=1 // loop_exit
      _
    %978 = vsyncpa [#allocation4], 1
    %s979 = scalar_lea.sflag [#allocation4], 1
    %980 = vsyncpa %s979, 1
    %981 = vsyncpa [#allocation10], 1
    %982 = vsyncpa [#allocation5], 1
    %s983 = scalar_lea.sflag [#allocation5], 1
    %984 = vsyncpa %s983, 1
    %985 = vsyncpa [#allocation13], 1
    %986 = vsyncpa [#allocation6], 1
    %s987 = scalar_lea.sflag [#allocation6], 1
    %988 = vsyncpa %s987, 1

</llo_original>
